<compile_context>
chip_gen: v6e
topology: v6e:2x2x1
jax: 0.10.0
libtpu: 0.0.40
codegen_flags: <defaults>
</compile_context>

<pallas_src>
import functools

import numpy as np
import jax
import jax.numpy as jnp
from jax import lax
from jax.experimental import pallas as pl
from jax.experimental.pallas import tpu as pltpu


# ---------------------------------------------------------------------------
# Wrapper-side glue: fold valid-conv connectivity into dense structured
# matrices.  These depend only on the weights (not on x), are tiny (<1 MB
# total) and are fully fused / constant-foldable by XLA under jit.
# ---------------------------------------------------------------------------
def _sel(K, n_in, n_out):
    """sel[k, i, o] = 1.0 iff i == o + k  (valid-convolution connectivity)."""
    k = np.arange(K)[:, None, None]
    i = np.arange(n_in)[None, :, None]
    o = np.arange(n_out)[None, None, :]
    return (i == o + k).astype(np.float32)


# ---------------------------------------------------------------------------
# Fused Pallas kernel: the entire convBlock forward.
# ---------------------------------------------------------------------------
def _conv_block_kernel(xf_ref, g1_ref, b1_ref, ga2_ref, ba2_ref, ga3_ref, ba3_ref,
                       gb_ref, bb_ref, gc_ref, bc_ref, gd_ref, bd_ref, out_ref,
                       *, x_width, p1_width, p2_width, p3_width):
    f32 = jnp.float32
    xf = xf_ref[...]                                   # (rows, U*F)

    # raw flattened input passes straight through to the first columns
    out_ref[:, 0:x_width] = xf

    # ---- p1: Conv2d(1 -> C1, (5, 9)) + bias + ReLU  == one structured matmul
    p1 = jnp.dot(xf, g1_ref[...], preferred_element_type=f32) + b1_ref[...]
    out_ref[:, x_width:x_width + p1_width] = jnp.maximum(p1, 0.0)

    # ---- p2: Conv1d(1->C)+ReLU (per-UAV block-diagonal), then Conv2d(C->C,(5,7))+ReLU
    y2 = jnp.maximum(
        jnp.dot(xf, ga2_ref[...], preferred_element_type=f32) + ba2_ref[...], 0.0)
    p2 = jnp.dot(y2, gc_ref[...], preferred_element_type=f32) + bc_ref[...]
    o2 = x_width + p1_width
    out_ref[:, o2:o2 + p2_width] = jnp.maximum(p2, 0.0)

    # ---- p3: Conv1d(1->C) -> Conv1d(C->C) (ReLU only after the pair), then Conv2d(C->C,(5,2))+ReLU
    z1 = jnp.dot(xf, ga3_ref[...], preferred_element_type=f32) + ba3_ref[...]
    z2 = jnp.maximum(
        jnp.dot(z1, gb_ref[...], preferred_element_type=f32) + bb_ref[...], 0.0)
    p3 = jnp.dot(z2, gd_ref[...], preferred_element_type=f32) + bd_ref[...]
    o3 = o2 + p2_width
    out_ref[:, o3:o3 + p3_width] = jnp.maximum(p3, 0.0)


# ---------------------------------------------------------------------------
# convBlock forward (mirrors the PyTorch module exactly)
# ---------------------------------------------------------------------------
def conv_block_forward(x, params, out_channel):
    B, U, F = x.shape
    oc = out_channel
    f32 = jnp.float32
    x = x.astype(f32)

    w1, b1 = params["p1_w"].astype(f32), params["p1_b"].astype(f32)
    w2a, b2a = params["p2_1d_w"].astype(f32), params["p2_1d_b"].astype(f32)
    w2b, b2b = params["p2_2d_w"].astype(f32), params["p2_2d_b"].astype(f32)
    w3a, b3a = params["p3_1d_w0"].astype(f32), params["p3_1d_b0"].astype(f32)
    w3b, b3b = params["p3_1d_w1"].astype(f32), params["p3_1d_b1"].astype(f32)
    w3c, b3c = params["p3_2d_w"].astype(f32), params["p3_2d_b"].astype(f32)

    C1, _, KH1, KW1 = w1.shape
    OH1, OW1 = U - KH1 + 1, F - KW1 + 1
    C2a, _, K2a = w2a.shape
    L2a = F - K2a + 1
    C2b, _, KH2, KW2 = w2b.shape
    OH2, OW2 = U - KH2 + 1, L2a - KW2 + 1
    C3a, _, K3a = w3a.shape
    L3a = F - K3a + 1
    C3b, _, K3b = w3b.shape
    L3b = L3a - K3b + 1
    C3c, _, KH3, KW3 = w3c.shape
    OH3, OW3 = U - KH3 + 1, L3b - KW3 + 1

    # PyTorch reshapes the p3 conv1d-stack output with out_channel[2][0]; that is only
    # consistent when oc[2][0] == oc[2][1] (same implicit constraint as the module).
    assert oc[2][0] == oc[2][1], "convBlock requires out_channel[2][0] == out_channel[2][1]"

    eye_u = np.eye(U, dtype=np.float32)

    # p1: (U*F) -> (C1*OH1*OW1), columns already in PyTorch (c, oh, ow) flatten order.
    g1 = jnp.einsum("ohw,hua,wfb->ufoab", w1[:, 0], _sel(KH1, U, OH1),
                    _sel(KW1, F, OW1)).reshape(U * F, C1 * OH1 * OW1)
    bias1 = jnp.repeat(b1, OH1 * OW1).reshape(1, -1)

    # first Conv1d of p2 / p3, applied per UAV row: block-diagonal over u.
    ga2 = jnp.einsum("ck,uv,kfp->ufvcp", w2a[:, 0], eye_u,
                     _sel(K2a, F, L2a)).reshape(U * F, U * C2a * L2a)
    ba2 = jnp.tile(jnp.repeat(b2a, L2a), U).reshape(1, -1)
    ga3 = jnp.einsum("ck,uv,kfp->ufvcp", w3a[:, 0], eye_u,
                     _sel(K3a, F, L3a)).reshape(U * F, U * C3a * L3a)
    ba3 = jnp.tile(jnp.repeat(b3a, L3a), U).reshape(1, -1)

    # p3 second Conv1d (C3a -> C3b), still per-UAV block-diagonal.
    gb = jnp.einsum("ock,uv,kjp->ucjvop", w3b, eye_u,
                    _sel(K3b, L3a, L3b)).reshape(U * C3a * L3a, U * C3b * L3b)
    bb = jnp.tile(jnp.repeat(b3b, L3b), U).reshape(1, -1)

    # p2 / p3 Conv2d stages: contract over (u, cin, pos); output columns come out in
    # PyTorch (c, oh, ow) flatten order so the kernel stores them directly.
    gc = jnp.einsum("ochw,hua,wjb->ucjoab", w2b, _sel(KH2, U, OH2),
                    _sel(KW2, L2a, OW2)).reshape(U * C2a * L2a, C2b * OH2 * OW2)
    bc = jnp.repeat(b2b, OH2 * OW2).reshape(1, -1)
    gd = jnp.einsum("ochw,hua,wjb->ucjoab", w3c, _sel(KH3, U, OH3),
                    _sel(KW3, L3b, OW3)).reshape(U * C3b * L3b, C3c * OH3 * OW3)
    bd = jnp.repeat(b3c, OH3 * OW3).reshape(1, -1)

    x_width = U * F
    p1_width = C1 * OH1 * OW1
    p2_width = C2b * OH2 * OW2
    p3_width = C3c * OH3 * OW3
    out_width = x_width + p1_width + p2_width + p3_width

    x_flat = x.reshape(B, x_width)

    # Rows (batch entries) are independent -> parallel row grid; shards across the two
    # TensorCores on v7x if batch_seqlen ever grows.  For tiny B this is a single block.
    tb = B if B <= 256 else 256
    grid = (pl.cdiv(B, tb),)

    def row_spec(shape):
        return pl.BlockSpec(shape, lambda i: (i, 0))

    def full_spec(shape):
        return pl.BlockSpec(shape, lambda i: (0, 0))

    weights = (g1, bias1, ga2, ba2, ga3, ba3, gb, bb, gc, bc, gd, bd)

    kernel = functools.partial(
        _conv_block_kernel,
        x_width=x_width, p1_width=p1_width, p2_width=p2_width, p3_width=p3_width)

    return pl.pallas_call(
        kernel,
        out_shape=jax.ShapeDtypeStruct((B, out_width), f32),
        grid=grid,
        in_specs=[row_spec((tb, x_width))] + [full_spec(w.shape) for w in weights],
        out_specs=row_spec((tb, out_width)),
        compiler_params=pltpu.CompilerParams(dimension_semantics=("parallel",)),
    )(x_flat, *weights)


# ---------------------------------------------------------------------------
# Pure-JAX reference (lax.conv), used only for the correctness check in main.
# ---------------------------------------------------------------------------
def _reference_forward(x, params, oc):
    B, U, F = x.shape

    def conv2d(inp, w, b):
        out = lax.conv_general_dilated(inp, w, (1, 1), "VALID",
                                       dimension_numbers=("NCHW", "OIHW", "NCHW"),
                                       precision=lax.Precision.HIGHEST)
        return out + b[None, :, None, None]

    def conv1d(inp, w, b):
        out = lax.conv_general_dilated(inp, w, (1,), "VALID",
                                       dimension_numbers=("NCH", "OIH", "NCH"),
                                       precision=lax.Precision.HIGHEST)
        return out + b[None, :, None]

    p1 = jax.nn.relu(conv2d(x[:, None], params["p1_w"], params["p1_b"])).reshape(B, -1)
    xc = x.reshape(B * U, F)[:, None, :]
    t = jax.nn.relu(conv1d(xc, params["p2_1d_w"], params["p2_1d_b"]))
    t = t.reshape(B, U, oc[1][0], -1).swapaxes(1, 2)
    p2 = jax.nn.relu(conv2d(t, params["p2_2d_w"], params["p2_2d_b"])).reshape(B, -1)
    s = conv1d(xc, params["p3_1d_w0"], params["p3_1d_b0"])
    s = jax.nn.relu(conv1d(s, params["p3_1d_w1"], params["p3_1d_b1"]))
    s = s.reshape(B, U, oc[2][0], -1).swapaxes(1, 2)
    p3 = jax.nn.relu(conv2d(s, params["p3_2d_w"], params["p3_2d_b"])).reshape(B, -1)
    return jnp.concatenate([x.reshape(B, -1), p1, p2, p3], axis=1)


def init_conv_block_params(key, out_channel):
    oc = out_channel
    shapes = {
        "p1_w": (oc[0][0], 1, 5, 9), "p1_b": (oc[0][0],),
        "p2_1d_w": (oc[1][0], 1, 6), "p2_1d_b": (oc[1][0],),
        "p2_2d_w": (oc[1][1], oc[1][0], 5, 7), "p2_2d_b": (oc[1][1],),
        "p3_1d_w0": (oc[2][0], 1, 6), "p3_1d_b0": (oc[2][0],),
        "p3_1d_w1": (oc[2][1], oc[2][0], 6), "p3_1d_b1": (oc[2][1],),
        "p3_2d_w": (oc[2][2], oc[2][1], 5, 2), "p3_2d_b": (oc[2][2],),
    }
    params = {}
    for name, shape in shapes.items():
        key, sub = jax.random.split(key)
        params[name] = 0.1 * jax.random.normal(sub, shape, dtype=jnp.float32)
    return params


if __name__ == "__main__":
    out_channel = [[4], [4, 4], [4, 4, 4]]
    batch_seqlen, uav_num, feature_num = 2, 8, 16

    key = jax.random.PRNGKey(0)
    key, xkey = jax.random.split(key)
    x = jax.random.normal(xkey, (batch_seqlen, uav_num, feature_num), dtype=jnp.float32)
    params = init_conv_block_params(key, out_channel)

    fwd = jax.jit(functools.partial(conv_block_forward, out_channel=out_channel))
    out = fwd(x, params)
    jax.block_until_ready(out)

    # Expected width: x flat 128 + p1 (4*4*8=128) + p2 (4*4*5=80) + p3 (4*4*5=80) = 416
    assert out.shape == (batch_seqlen, 416), out.shape

    ref = _reference_forward(x, params, out_channel)
    err = float(jnp.max(jnp.abs(out - ref)))
    assert jnp.allclose(out, ref, atol=1e-2, rtol=1e-2), err

    print("KERNEL_OK")
</pallas_src>

<mosaic_0001>
module attributes {stable_mosaic.version = 11 : i64} {
  func.func @_conv_block_kernel(%arg0: i32, %arg1: memref<2x128xf32, #tpu.memory_space<vmem>>, %arg2: memref<128x128xf32, #tpu.memory_space<vmem>>, %arg3: memref<1x128xf32, #tpu.memory_space<vmem>>, %arg4: memref<128x352xf32, #tpu.memory_space<vmem>>, %arg5: memref<1x352xf32, #tpu.memory_space<vmem>>, %arg6: memref<128x352xf32, #tpu.memory_space<vmem>>, %arg7: memref<1x352xf32, #tpu.memory_space<vmem>>, %arg8: memref<352x192xf32, #tpu.memory_space<vmem>>, %arg9: memref<1x192xf32, #tpu.memory_space<vmem>>, %arg10: memref<352x80xf32, #tpu.memory_space<vmem>>, %arg11: memref<1x80xf32, #tpu.memory_space<vmem>>, %arg12: memref<192x80xf32, #tpu.memory_space<vmem>>, %arg13: memref<1x80xf32, #tpu.memory_space<vmem>>, %arg14: memref<2x416xf32, #tpu.memory_space<vmem>>) attributes {dimension_semantics = [#tpu.dimension_semantics<parallel>], iteration_bounds = array<i64: 1>, scalar_prefetch = 0 : i64, scratch_operands = 0 : i64, tpu.core_type = #tpu.core_type<tc>, window_params = [{transform_indices = @transform_0, window_bounds = array<i64: 2, 128>}, {pipeline_mode = #tpu.pipeline_mode<synchronous>, transform_indices = @transform_1, window_bounds = array<i64: 128, 128>}, {pipeline_mode = #tpu.pipeline_mode<synchronous>, transform_indices = @transform_2, window_bounds = array<i64: 1, 128>}, {pipeline_mode = #tpu.pipeline_mode<synchronous>, transform_indices = @transform_3, window_bounds = array<i64: 128, 352>}, {pipeline_mode = #tpu.pipeline_mode<synchronous>, transform_indices = @transform_4, window_bounds = array<i64: 1, 352>}, {pipeline_mode = #tpu.pipeline_mode<synchronous>, transform_indices = @transform_5, window_bounds = array<i64: 128, 352>}, {pipeline_mode = #tpu.pipeline_mode<synchronous>, transform_indices = @transform_6, window_bounds = array<i64: 1, 352>}, {pipeline_mode = #tpu.pipeline_mode<synchronous>, transform_indices = @transform_7, window_bounds = array<i64: 352, 192>}, {pipeline_mode = #tpu.pipeline_mode<synchronous>, transform_indices = @transform_8, window_bounds = array<i64: 1, 192>}, {pipeline_mode = #tpu.pipeline_mode<synchronous>, transform_indices = @transform_9, window_bounds = array<i64: 352, 80>}, {pipeline_mode = #tpu.pipeline_mode<synchronous>, transform_indices = @transform_10, window_bounds = array<i64: 1, 80>}, {pipeline_mode = #tpu.pipeline_mode<synchronous>, transform_indices = @transform_11, window_bounds = array<i64: 192, 80>}, {pipeline_mode = #tpu.pipeline_mode<synchronous>, transform_indices = @transform_12, window_bounds = array<i64: 1, 80>}, {transform_indices = @transform_13, window_bounds = array<i64: 2, 416>}]} {
    %c0 = arith.constant 0 : index
    %c0_0 = arith.constant 0 : index
    %0 = vector.load %arg1[%c0, %c0_0] : memref<2x128xf32, #tpu.memory_space<vmem>>, vector<2x128xf32>
    %c0_1 = arith.constant 0 : index
    %c0_2 = arith.constant 0 : index
    %1 = vector.load %arg14[%c0_1, %c0_2] : memref<2x416xf32, #tpu.memory_space<vmem>>, vector<2x128xf32>
    tpu.vector_store %arg14[%c0_1, %c0_2], %0 {strides = array<i32>} : memref<2x416xf32, #tpu.memory_space<vmem>>, vector<2x128xf32>,
    %c0_3 = arith.constant 0 : index
    %c0_4 = arith.constant 0 : index
    %2 = vector.load %arg2[%c0_3, %c0_4] : memref<128x128xf32, #tpu.memory_space<vmem>>, vector<128x128xf32>
    %cst = arith.constant dense<0.000000e+00> : vector<2x128xf32>
    %3 = tpu.matmul %0, %2, %cst {dimension_numbers = #tpu.dot_dimension_numbers<[1], [0], [0], [1], [0, 0, 1, 1], [], []>} : vector<2x128xf32>, vector<128x128xf32>, vector<2x128xf32> -> vector<2x128xf32>
    %c0_5 = arith.constant 0 : index
    %c0_6 = arith.constant 0 : index
    %4 = vector.load %arg3[%c0_5, %c0_6] : memref<1x128xf32, #tpu.memory_space<vmem>>, vector<1x128xf32>
    %5 = vector.broadcast %4 : vector<1x128xf32> to vector<2x128xf32>
    %6 = arith.addf %3, %5 : vector<2x128xf32>
    %cst_7 = arith.constant 0.000000e+00 : f32
    %7 = vector.broadcast %cst_7 : f32 to vector<2x128xf32>
    %8 = arith.maximumf %6, %7 : vector<2x128xf32>
    %c0_8 = arith.constant 0 : index
    %c128 = arith.constant 128 : index
    %9 = vector.load %arg14[%c0_8, %c128] : memref<2x416xf32, #tpu.memory_space<vmem>>, vector<2x128xf32>
    tpu.vector_store %arg14[%c0_8, %c128], %8 {strides = array<i32>} : memref<2x416xf32, #tpu.memory_space<vmem>>, vector<2x128xf32>,
    %c0_9 = arith.constant 0 : index
    %c0_10 = arith.constant 0 : index
    %10 = vector.load %arg4[%c0_9, %c0_10] : memref<128x352xf32, #tpu.memory_space<vmem>>, vector<128x352xf32>
    %cst_11 = arith.constant dense<0.000000e+00> : vector<2x352xf32>
    %11 = tpu.matmul %0, %10, %cst_11 {dimension_numbers = #tpu.dot_dimension_numbers<[1], [0], [0], [1], [0, 0, 1, 1], [], []>} : vector<2x128xf32>, vector<128x352xf32>, vector<2x352xf32> -> vector<2x352xf32>
    %c0_12 = arith.constant 0 : index
    %c0_13 = arith.constant 0 : index
    %12 = vector.load %arg5[%c0_12, %c0_13] : memref<1x352xf32, #tpu.memory_space<vmem>>, vector<1x352xf32>
    %13 = vector.broadcast %12 : vector<1x352xf32> to vector<2x352xf32>
    %14 = arith.addf %11, %13 : vector<2x352xf32>
    %cst_14 = arith.constant 0.000000e+00 : f32
    %15 = vector.broadcast %cst_14 : f32 to vector<2x352xf32>
    %16 = arith.maximumf %14, %15 : vector<2x352xf32>
    %c0_15 = arith.constant 0 : index
    %c0_16 = arith.constant 0 : index
    %17 = vector.load %arg10[%c0_15, %c0_16] : memref<352x80xf32, #tpu.memory_space<vmem>>, vector<352x80xf32>
    %cst_17 = arith.constant dense<0.000000e+00> : vector<2x80xf32>
    %18 = tpu.matmul %16, %17, %cst_17 {dimension_numbers = #tpu.dot_dimension_numbers<[1], [0], [0], [1], [0, 0, 1, 1], [], []>} : vector<2x352xf32>, vector<352x80xf32>, vector<2x80xf32> -> vector<2x80xf32>
    %c0_18 = arith.constant 0 : index
    %c0_19 = arith.constant 0 : index
    %19 = vector.load %arg11[%c0_18, %c0_19] : memref<1x80xf32, #tpu.memory_space<vmem>>, vector<1x80xf32>
    %20 = vector.broadcast %19 : vector<1x80xf32> to vector<2x80xf32>
    %21 = arith.addf %18, %20 : vector<2x80xf32>
    %cst_20 = arith.constant 0.000000e+00 : f32
    %22 = vector.broadcast %cst_20 : f32 to vector<2x80xf32>
    %23 = arith.maximumf %21, %22 : vector<2x80xf32>
    %c0_21 = arith.constant 0 : index
    %c256 = arith.constant 256 : index
    %24 = vector.load %arg14[%c0_21, %c256] : memref<2x416xf32, #tpu.memory_space<vmem>>, vector<2x80xf32>
    tpu.vector_store %arg14[%c0_21, %c256], %23 {strides = array<i32>} : memref<2x416xf32, #tpu.memory_space<vmem>>, vector<2x80xf32>,
    %c0_22 = arith.constant 0 : index
    %c0_23 = arith.constant 0 : index
    %25 = vector.load %arg6[%c0_22, %c0_23] : memref<128x352xf32, #tpu.memory_space<vmem>>, vector<128x352xf32>
    %cst_24 = arith.constant dense<0.000000e+00> : vector<2x352xf32>
    %26 = tpu.matmul %0, %25, %cst_24 {dimension_numbers = #tpu.dot_dimension_numbers<[1], [0], [0], [1], [0, 0, 1, 1], [], []>} : vector<2x128xf32>, vector<128x352xf32>, vector<2x352xf32> -> vector<2x352xf32>
    %c0_25 = arith.constant 0 : index
    %c0_26 = arith.constant 0 : index
    %27 = vector.load %arg7[%c0_25, %c0_26] : memref<1x352xf32, #tpu.memory_space<vmem>>, vector<1x352xf32>
    %28 = vector.broadcast %27 : vector<1x352xf32> to vector<2x352xf32>
    %29 = arith.addf %26, %28 : vector<2x352xf32>
    %c0_27 = arith.constant 0 : index
    %c0_28 = arith.constant 0 : index
    %30 = vector.load %arg8[%c0_27, %c0_28] : memref<352x192xf32, #tpu.memory_space<vmem>>, vector<352x192xf32>
    %cst_29 = arith.constant dense<0.000000e+00> : vector<2x192xf32>
    %31 = tpu.matmul %29, %30, %cst_29 {dimension_numbers = #tpu.dot_dimension_numbers<[1], [0], [0], [1], [0, 0, 1, 1], [], []>} : vector<2x352xf32>, vector<352x192xf32>, vector<2x192xf32> -> vector<2x192xf32>
    %c0_30 = arith.constant 0 : index
    %c0_31 = arith.constant 0 : index
    %32 = vector.load %arg9[%c0_30, %c0_31] : memref<1x192xf32, #tpu.memory_space<vmem>>, vector<1x192xf32>
    %33 = vector.broadcast %32 : vector<1x192xf32> to vector<2x192xf32>
    %34 = arith.addf %31, %33 : vector<2x192xf32>
    %cst_32 = arith.constant 0.000000e+00 : f32
    %35 = vector.broadcast %cst_32 : f32 to vector<2x192xf32>
    %36 = arith.maximumf %34, %35 : vector<2x192xf32>
    %c0_33 = arith.constant 0 : index
    %c0_34 = arith.constant 0 : index
    %37 = vector.load %arg12[%c0_33, %c0_34] : memref<192x80xf32, #tpu.memory_space<vmem>>, vector<192x80xf32>
    %cst_35 = arith.constant dense<0.000000e+00> : vector<2x80xf32>
    %38 = tpu.matmul %36, %37, %cst_35 {dimension_numbers = #tpu.dot_dimension_numbers<[1], [0], [0], [1], [0, 0, 1, 1], [], []>} : vector<2x192xf32>, vector<192x80xf32>, vector<2x80xf32> -> vector<2x80xf32>
    %c0_36 = arith.constant 0 : index
    %c0_37 = arith.constant 0 : index
    %39 = vector.load %arg13[%c0_36, %c0_37] : memref<1x80xf32, #tpu.memory_space<vmem>>, vector<1x80xf32>
    %40 = vector.broadcast %39 : vector<1x80xf32> to vector<2x80xf32>
    %41 = arith.addf %38, %40 : vector<2x80xf32>
    %cst_38 = arith.constant 0.000000e+00 : f32
    %42 = vector.broadcast %cst_38 : f32 to vector<2x80xf32>
    %43 = arith.maximumf %41, %42 : vector<2x80xf32>
    %c0_39 = arith.constant 0 : index
    %c336 = arith.constant 336 : index
    %44 = vector.load %arg14[%c0_39, %c336] : memref<2x416xf32, #tpu.memory_space<vmem>>, vector<2x80xf32>
    tpu.vector_store %arg14[%c0_39, %c336], %43 {strides = array<i32>} : memref<2x416xf32, #tpu.memory_space<vmem>>, vector<2x80xf32>,
    return
  }
  func.func @transform_0(%arg0: i32) -> (i32, i32) {
    %c0_i32 = arith.constant 0 : i32
    %c0_i32_0 = arith.constant 0 : i32
    return %arg0, %c0_i32 : i32, i32
  }
  func.func @transform_1(%arg0: i32) -> (i32, i32) {
    %c0_i32 = arith.constant 0 : i32
    %c0_i32_0 = arith.constant 0 : i32
    %c0_i32_1 = arith.constant 0 : i32
    return %c0_i32, %c0_i32_0 : i32, i32
  }
  func.func @transform_2(%arg0: i32) -> (i32, i32) {
    %c0_i32 = arith.constant 0 : i32
    %c0_i32_0 = arith.constant 0 : i32
    %c0_i32_1 = arith.constant 0 : i32
    return %c0_i32, %c0_i32_0 : i32, i32
  }
  func.func @transform_3(%arg0: i32) -> (i32, i32) {
    %c0_i32 = arith.constant 0 : i32
    %c0_i32_0 = arith.constant 0 : i32
    %c0_i32_1 = arith.constant 0 : i32
    return %c0_i32, %c0_i32_0 : i32, i32
  }
  func.func @transform_4(%arg0: i32) -> (i32, i32) {
    %c0_i32 = arith.constant 0 : i32
    %c0_i32_0 = arith.constant 0 : i32
    %c0_i32_1 = arith.constant 0 : i32
    return %c0_i32, %c0_i32_0 : i32, i32
  }
  func.func @transform_5(%arg0: i32) -> (i32, i32) {
    %c0_i32 = arith.constant 0 : i32
    %c0_i32_0 = arith.constant 0 : i32
    %c0_i32_1 = arith.constant 0 : i32
    return %c0_i32, %c0_i32_0 : i32, i32
  }
  func.func @transform_6(%arg0: i32) -> (i32, i32) {
    %c0_i32 = arith.constant 0 : i32
    %c0_i32_0 = arith.constant 0 : i32
    %c0_i32_1 = arith.constant 0 : i32
    return %c0_i32, %c0_i32_0 : i32, i32
  }
  func.func @transform_7(%arg0: i32) -> (i32, i32) {
    %c0_i32 = arith.constant 0 : i32
    %c0_i32_0 = arith.constant 0 : i32
    %c0_i32_1 = arith.constant 0 : i32
    return %c0_i32, %c0_i32_0 : i32, i32
  }
  func.func @transform_8(%arg0: i32) -> (i32, i32) {
    %c0_i32 = arith.constant 0 : i32
    %c0_i32_0 = arith.constant 0 : i32
    %c0_i32_1 = arith.constant 0 : i32
    return %c0_i32, %c0_i32_0 : i32, i32
  }
  func.func @transform_9(%arg0: i32) -> (i32, i32) {
    %c0_i32 = arith.constant 0 : i32
    %c0_i32_0 = arith.constant 0 : i32
    %c0_i32_1 = arith.constant 0 : i32
    return %c0_i32, %c0_i32_0 : i32, i32
  }
  func.func @transform_10(%arg0: i32) -> (i32, i32) {
    %c0_i32 = arith.constant 0 : i32
    %c0_i32_0 = arith.constant 0 : i32
    %c0_i32_1 = arith.constant 0 : i32
    return %c0_i32, %c0_i32_0 : i32, i32
  }
  func.func @transform_11(%arg0: i32) -> (i32, i32) {
    %c0_i32 = arith.constant 0 : i32
    %c0_i32_0 = arith.constant 0 : i32
    %c0_i32_1 = arith.constant 0 : i32
    return %c0_i32, %c0_i32_0 : i32, i32
  }
  func.func @transform_12(%arg0: i32) -> (i32, i32) {
    %c0_i32 = arith.constant 0 : i32
    %c0_i32_0 = arith.constant 0 : i32
    %c0_i32_1 = arith.constant 0 : i32
    return %c0_i32, %c0_i32_0 : i32, i32
  }
  func.func @transform_13(%arg0: i32) -> (i32, i32) {
    %c0_i32 = arith.constant 0 : i32
    %c0_i32_0 = arith.constant 0 : i32
    return %arg0, %c0_i32 : i32, i32
  }
}

</mosaic_0001>

<llo_original>
// kernel: tile.13
$region0: #{tile.13}
  %s0 = inlined_call_operand.vmem [shape: f32[4,11], index: 0, kind: input, shape index: {}]
  %s1 = inlined_call_operand.vmem [shape: f32[44], index: 1, kind: output, shape index: {}]
  $region1: #{tile.13} parent=0
    #allocation0 [shape = 'u8[4096]{0}', space=vmem, size = 0x1000, scoped, tag = 'scoped mem for output reshape']
    #allocation1 [shape = 'u8[4096]{0}', space=vmem, size = 0x1000, scoped, tag = 'scoped mem for input reshape']
    %s3 = sshll.u32 1, 4
    %s4 = ssub.s32 %s3, 1
    %v5 = vld [vmem:[%s0] sm:%s4]
    %6 = vst [vmem:[#allocation1] sm:%s4] %v5
    %v7 = vld [vmem:[#allocation1] sm:$0x1]
    %vm8 = vcmask 89088
    %9 = vst.msk [vmem:[#allocation0] sm:$0x1] %vm8, %v7
    %s10 = scalar_lea.vmem [#allocation1], 3
    %v11 = vld [vmem:[%s10] sm:$0x1]
    %12 = vrot.lane.b32.xlu0 %v11, 33
    %v13 = vpop.permute.xlu0 %12
    %vm14 = vcmask 359688
    %15 = vst.msk [vmem:[#allocation0] sm:$0x1] %vm14, %v13
    %s16 = scalar_lea.vmem [#allocation1], 2
    %v17 = vld [vmem:[%s16] sm:$0x1]
    %18 = vrot.lane.b32.xlu0 %v17, 22
    %v19 = vpop.permute.xlu0 %18
    %vm20 = vcmask 269488
    %21 = vst.msk [vmem:[#allocation0] sm:$0x1] %vm20, %v19
    %s22 = scalar_lea.vmem [#allocation1], 1
    %v23 = vld [vmem:[%s22] sm:$0x1]
    %24 = vrot.lane.b32.xlu0 %v23, 11
    %v25 = vpop.permute.xlu0 %24
    %vm26 = vcmask 179288
    %27 = vst.msk [vmem:[#allocation0] sm:$0x1] %vm26, %v25
    %s29 = sshll.u32 1, 1
    %s30 = ssub.s32 %s29, 1
    %v32 = vld [vmem:[#allocation0] sm:%s30]
    %s33 = sshll.u32 1, 1
    %s34 = ssub.s32 %s33, 1
    %35 = vst [vmem:[%s1] sm:%s34] %v32

// kernel: tile.14
$region0: #{tile.14}
  #allocation0 [shape = 's32[1]{0}', space=sflag, size = 0x4, scoped, tag = 'scoped memory for tile.14']
  %s0 = inlined_call_operand.vmem [shape: f32[44], index: 0, kind: input, shape index: {}]
  %s1 = inlined_call_operand.vmem [shape: f32[8,44], index: 1, kind: output, shape index: {}]
  // Predicated region
  $region2: #{tile.14} parent=0 // pred_check
    _
  $region3: #{tile.14} parent=0 // pred_check_branch
    %3 = sbr.rel (0) target = $region5
  $region4: #{tile.14} parent=0 // pred_region
    _
  $region5: #{tile.14} parent=0 // pred_fallthru
    _
  %v4 = vld [vmem:[%s0] ss:$0 sm:$0xff]
  %5 = vst [vmem:[%s1] sm:$0xff] %v4

// kernel: tile.15
$region0: #{tile.15}
  %s0 = inlined_call_operand.vmem [shape: f32[8,44], index: 0, kind: input, shape index: {}]
  %s1 = inlined_call_operand.vmem [shape: f32[1,352], index: 1, kind: output, shape index: {}]
  $region1: #{tile.15} parent=0
    #allocation0 [shape = 'u8[12288]{0}', space=vmem, size = 0x3000, scoped, tag = 'scoped mem for output reshape']
    %v2 = vld [vmem:[%s0] sm:$0x1]
    %vm3 = vcmask 359424
    %4 = vst.msk [vmem:[#allocation0] sm:$0x1] %vm3, %v2
    %s5 = scalar_lea.vmem %s0, 5
    %v6 = vld [vmem:[%s5] sm:$0x1]
    %s7 = scalar_lea.vmem %s0, 5
    %v8 = vld [vmem:[%s7] sm:$0x1]
    %vm9 = vcmask 293888
    %v10 = vsel %vm9, %v8, %v6
    %11 = vrot.lane.b32.xlu0 %v10, 92
    %v12 = vpop.permute.xlu0 %11
    %vm13 = vcmask 64512
    %s14 = scalar_lea.vmem [#allocation0], 16
    %15 = vst.msk [vmem:[%s14] sm:$0x1] %vm13, %v12
    %vm16 = vcmask 1048288
    %s17 = scalar_lea.vmem [#allocation0], 8
    %18 = vst.msk [vmem:[%s17] sm:$0x1] %vm16, %v12
    %s19 = scalar_lea.vmem %s0, 2
    %v20 = vld [vmem:[%s19] sm:$0x1]
    %s21 = scalar_lea.vmem %s0, 2
    %v22 = vld [vmem:[%s21] sm:$0x1]
    %vm23 = vcmask 326656
    %v24 = vsel %vm23, %v22, %v20
    %25 = vrot.lane.b32.xlu0 %v24, 88
    %v26 = vpop.permute.xlu0 %25
    %vm27 = vcmask 31744
    %s28 = scalar_lea.vmem [#allocation0], 8
    %29 = vst.msk [vmem:[%s28] sm:$0x1] %vm27, %v26
    %vm30 = vcmask 1048256
    %31 = vst.msk [vmem:[#allocation0] sm:$0x1] %vm30, %v26
    %s32 = scalar_lea.vmem %s0, 7
    %v33 = vld [vmem:[%s32] sm:$0x1]
    %34 = vrot.lane.b32.xlu0 %v33, 52
    %v35 = vpop.permute.xlu0 %34
    %vm36 = vcmask 785824
    %s37 = scalar_lea.vmem [#allocation0], 16
    %38 = vst.msk [vmem:[%s37] sm:$0x1] %vm36, %v35
    %s39 = scalar_lea.vmem %s0, 4
    %v40 = vld [vmem:[%s39] sm:$0x1]
    %41 = vrot.lane.b32.xlu0 %v40, 48
    %v42 = vpop.permute.xlu0 %41
    %vm43 = vcmask 753024
    %s44 = scalar_lea.vmem [#allocation0], 8
    %45 = vst.msk [vmem:[%s44] sm:$0x1] %vm43, %v42
    %s46 = scalar_lea.vmem %s0, 1
    %v47 = vld [vmem:[%s46] sm:$0x1]
    %48 = vrot.lane.b32.xlu0 %v47, 44
    %v49 = vpop.permute.xlu0 %48
    %vm50 = vcmask 720224
    %51 = vst.msk [vmem:[#allocation0] sm:$0x1] %vm50, %v49
    %s52 = scalar_lea.vmem %s0, 6
    %v53 = vld [vmem:[%s52] sm:$0x1]
    %54 = vrot.lane.b32.xlu0 %v53, 8
    %v55 = vpop.permute.xlu0 %54
    %vm56 = vcmask 425024
    %s57 = scalar_lea.vmem [#allocation0], 16
    %58 = vst.msk [vmem:[%s57] sm:$0x1] %vm56, %v55
    %s59 = scalar_lea.vmem %s0, 3
    %v60 = vld [vmem:[%s59] sm:$0x1]
    %61 = vrot.lane.b32.xlu0 %v60, 4
    %v62 = vpop.permute.xlu0 %61
    %vm63 = vcmask 392224
    %s64 = scalar_lea.vmem [#allocation0], 8
    %65 = vst.msk [vmem:[%s64] sm:$0x1] %vm63, %v62
    %s67 = sshll.u32 1, 1
    %s68 = ssub.s32 %s67, 1
    %v70 = vld [vmem:[#allocation0] sm:%s68]
    %s71 = sshll.u32 1, 1
    %s72 = ssub.s32 %s71, 1
    %73 = vst [vmem:[%s1] sm:%s72] %v70
    %s74 = scalar_lea.vmem [#allocation0], 8
    %v75 = vld [vmem:[%s74] sm:%s68]
    %s76 = sshll.u32 1, 1
    %s77 = ssub.s32 %s76, 1
    %s78 = scalar_lea.vmem %s1, 1
    %79 = vst [vmem:[%s78] sm:%s77] %v75
    %s80 = scalar_lea.vmem [#allocation0], 16
    %v81 = vld [vmem:[%s80] sm:%s68]
    %s82 = sshll.u32 1, 1
    %s83 = ssub.s32 %s82, 1
    %s84 = smul.addr 1, 2
    %s85 = scalar_lea.vmem %s1, %s84
    %86 = vst [vmem:[%s85] sm:%s83] %v81

// kernel: tile.21
$region0: #{tile.21}
  %s0 = inlined_call_operand.vmem [shape: f32[4,6], index: 0, kind: input, shape index: {}]
  %s1 = inlined_call_operand.vmem [shape: f32[24], index: 1, kind: output, shape index: {}]
  $region1: #{tile.21} parent=0
    #allocation0 [shape = 'u8[4096]{0}', space=vmem, size = 0x1000, scoped, tag = 'scoped mem for output reshape']
    #allocation1 [shape = 'u8[4096]{0}', space=vmem, size = 0x1000, scoped, tag = 'scoped mem for input reshape']
    %s3 = sshll.u32 1, 4
    %s4 = ssub.s32 %s3, 1
    %v5 = vld [vmem:[%s0] sm:%s4]
    %6 = vst [vmem:[#allocation1] sm:%s4] %v5
    %v7 = vld [vmem:[#allocation1] sm:$0x1]
    %vm8 = vcmask 48128
    %9 = vst.msk [vmem:[#allocation0] sm:$0x1] %vm8, %v7
    %s10 = scalar_lea.vmem [#allocation1], 3
    %v11 = vld [vmem:[%s10] sm:$0x1]
    %12 = vrot.lane.b32.xlu0 %v11, 18
    %v13 = vpop.permute.xlu0 %12
    %vm14 = vcmask 195728
    %15 = vst.msk [vmem:[#allocation0] sm:$0x1] %vm14, %v13
    %s16 = scalar_lea.vmem [#allocation1], 2
    %v17 = vld [vmem:[%s16] sm:$0x1]
    %18 = vrot.lane.b32.xlu0 %v17, 12
    %v19 = vpop.permute.xlu0 %18
    %vm20 = vcmask 146528
    %21 = vst.msk [vmem:[#allocation0] sm:$0x1] %vm20, %v19
    %s22 = scalar_lea.vmem [#allocation1], 1
    %v23 = vld [vmem:[%s22] sm:$0x1]
    %24 = vrot.lane.b32.xlu0 %v23, 6
    %v25 = vpop.permute.xlu0 %24
    %vm26 = vcmask 97328
    %27 = vst.msk [vmem:[#allocation0] sm:$0x1] %vm26, %v25
    %s29 = sshll.u32 1, 1
    %s30 = ssub.s32 %s29, 1
    %v32 = vld [vmem:[#allocation0] sm:%s30]
    %s33 = sshll.u32 1, 1
    %s34 = ssub.s32 %s33, 1
    %35 = vst [vmem:[%s1] sm:%s34] %v32

// kernel: tile.22
$region0: #{tile.22}
  #allocation0 [shape = 's32[1]{0}', space=sflag, size = 0x4, scoped, tag = 'scoped memory for tile.22']
  %s0 = inlined_call_operand.vmem [shape: f32[24], index: 0, kind: input, shape index: {}]
  %s1 = inlined_call_operand.vmem [shape: f32[8,24], index: 1, kind: output, shape index: {}]
  // Predicated region
  $region2: #{tile.22} parent=0 // pred_check
    _
  $region3: #{tile.22} parent=0 // pred_check_branch
    %3 = sbr.rel (0) target = $region5
  $region4: #{tile.22} parent=0 // pred_region
    _
  $region5: #{tile.22} parent=0 // pred_fallthru
    _
  %v4 = vld [vmem:[%s0] ss:$0 sm:$0xff]
  %5 = vst [vmem:[%s1] sm:$0xff] %v4

// kernel: tile.23
$region0: #{tile.23}
  %s0 = inlined_call_operand.vmem [shape: f32[8,24], index: 0, kind: input, shape index: {}]
  %s1 = inlined_call_operand.vmem [shape: f32[1,192], index: 1, kind: output, shape index: {}]
  $region1: #{tile.23} parent=0
    #allocation0 [shape = 'u8[8192]{0}', space=vmem, size = 0x2000, scoped, tag = 'scoped mem for output reshape']
    %v2 = vld [vmem:[%s0] sm:$0x1]
    %vm3 = vcmask 195584
    %4 = vst.msk [vmem:[#allocation0] sm:$0x1] %vm3, %v2
    %s5 = scalar_lea.vmem %s0, 5
    %v6 = vld [vmem:[%s5] sm:$0x1]
    %s7 = scalar_lea.vmem %s0, 5
    %v8 = vld [vmem:[%s7] sm:$0x1]
    %vm9 = vcmask 64512
    %v10 = vsel %vm9, %v8, %v6
    %11 = vrot.lane.b32.xlu0 %v10, 120
    %v12 = vpop.permute.xlu0 %11
    %vm13 = vcmask 130048
    %s14 = scalar_lea.vmem [#allocation0], 8
    %15 = vst.msk [vmem:[%s14] sm:$0x1] %vm13, %v12
    %vm16 = vcmask 1048512
    %17 = vst.msk [vmem:[#allocation0] sm:$0x1] %vm16, %v12
    %s18 = scalar_lea.vmem %s0, 4
    %v19 = vld [vmem:[%s18] sm:$0x1]
    %20 = vrot.lane.b32.xlu0 %v19, 96
    %v21 = vpop.permute.xlu0 %20
    %vm22 = vcmask 982784
    %23 = vst.msk [vmem:[#allocation0] sm:$0x1] %vm22, %v21
    %s24 = scalar_lea.vmem %s0, 3
    %v25 = vld [vmem:[%s24] sm:$0x1]
    %26 = vrot.lane.b32.xlu0 %v25, 72
    %v27 = vpop.permute.xlu0 %26
    %vm28 = vcmask 785984
    %29 = vst.msk [vmem:[#allocation0] sm:$0x1] %vm28, %v27
    %s30 = scalar_lea.vmem %s0, 2
    %v31 = vld [vmem:[%s30] sm:$0x1]
    %32 = vrot.lane.b32.xlu0 %v31, 48
    %v33 = vpop.permute.xlu0 %32
    %vm34 = vcmask 589184
    %35 = vst.msk [vmem:[#allocation0] sm:$0x1] %vm34, %v33
    %s36 = scalar_lea.vmem %s0, 7
    %v37 = vld [vmem:[%s36] sm:$0x1]
    %38 = vrot.lane.b32.xlu0 %v37, 40
    %v39 = vpop.permute.xlu0 %38
    %vm40 = vcmask 523584
    %s41 = scalar_lea.vmem [#allocation0], 8
    %42 = vst.msk [vmem:[%s41] sm:$0x1] %vm40, %v39
    %s43 = scalar_lea.vmem %s0, 1
    %v44 = vld [vmem:[%s43] sm:$0x1]
    %45 = vrot.lane.b32.xlu0 %v44, 24
    %v46 = vpop.permute.xlu0 %45
    %vm47 = vcmask 392384
    %48 = vst.msk [vmem:[#allocation0] sm:$0x1] %vm47, %v46
    %s49 = scalar_lea.vmem %s0, 6
    %v50 = vld [vmem:[%s49] sm:$0x1]
    %51 = vrot.lane.b32.xlu0 %v50, 16
    %v52 = vpop.permute.xlu0 %51
    %vm53 = vcmask 326784
    %s54 = scalar_lea.vmem [#allocation0], 8
    %55 = vst.msk [vmem:[%s54] sm:$0x1] %vm53, %v52
    %s57 = sshll.u32 1, 1
    %s58 = ssub.s32 %s57, 1
    %v60 = vld [vmem:[#allocation0] sm:%s58]
    %s61 = sshll.u32 1, 1
    %s62 = ssub.s32 %s61, 1
    %63 = vst [vmem:[%s1] sm:%s62] %v60
    %s64 = scalar_lea.vmem [#allocation0], 8
    %v65 = vld [vmem:[%s64] sm:%s58]
    %s66 = sshll.u32 1, 1
    %s67 = ssub.s32 %s66, 1
    %s68 = scalar_lea.vmem %s1, 1
    %69 = vst [vmem:[%s68] sm:%s67] %v65

// kernel: conv_block_forward.1
$region0: #{conv_block_forward.1}
  #allocation0 [shape = 'u32[]', space=smem, size = 0x4, offset = 0x4, fixed_abs, tag = 'smem constant byte address 0x4 - core index']
  #allocation1 [shape = 'u32[144,128]{1,0:T(1,128)}', space=vmem, size = 0x12000, scoped, tag = 'internal scratch']
  %s0 = inlined_call_operand.vmem [shape: f32[2,128], index: 0, kind: input, shape index: {}]
  %s1 = inlined_call_operand.vmem [shape: f32[128,128], index: 1, kind: input, shape index: {}]
  %s2 = inlined_call_operand.vmem [shape: f32[1,128], index: 2, kind: input, shape index: {}]
  %s3 = inlined_call_operand.vmem [shape: f32[128,352], index: 3, kind: input, shape index: {}]
  %s4 = inlined_call_operand.vmem [shape: f32[1,352], index: 4, kind: input, shape index: {}]
  %s5 = inlined_call_operand.vmem [shape: f32[128,352], index: 5, kind: input, shape index: {}]
  %s6 = inlined_call_operand.vmem [shape: f32[1,352], index: 6, kind: input, shape index: {}]
  %s7 = inlined_call_operand.vmem [shape: f32[352,192], index: 7, kind: input, shape index: {}]
  %s8 = inlined_call_operand.vmem [shape: f32[1,192], index: 8, kind: input, shape index: {}]
  %s9 = inlined_call_operand.vmem [shape: f32[352,80], index: 9, kind: input, shape index: {}]
  %s10 = inlined_call_operand.vmem [shape: f32[1,80], index: 10, kind: input, shape index: {}]
  %s11 = inlined_call_operand.vmem [shape: f32[192,80], index: 11, kind: input, shape index: {}]
  %s12 = inlined_call_operand.vmem [shape: f32[1,80], index: 12, kind: input, shape index: {}]
  %s13 = inlined_call_operand.hbm [shape: f32[2,416], index: 13, kind: output, shape index: {}]
  %s14 = sld [smem:[#allocation0]]
  $region62: #{conv_block_forward.1} parent=0
    _
  %s16 = ssub.s32 1, %s14
  %s17 = scalar_select 0, %s16, %s14
  $region1: #{conv_block_forward.1} parent=0
    #allocation2 [shape = 'u8[4096]{0}', space=vmem, size = 0x1000, scoped, tag = 'output window, operand 0, single buffered']
    #allocation3 [shape = 's32[1]{0}', space=sflag, size = 0x4, scoped, tag = 'scoped memory for conv_block_forward.1']
    %18 = vsyncpa [#allocation3], 0
    // Predicated region
    $region2: #{conv_block_forward.1} parent=1 // pred_check
      _
    $region3: #{conv_block_forward.1} parent=1 // pred_check_branch
      %20 = sbr.rel (0) target = $region5
    $region4: #{conv_block_forward.1} parent=1 // pred_region
      _
    $region5: #{conv_block_forward.1} parent=1 // pred_fallthru
      _
    // Predicated region
    $region6: #{conv_block_forward.1} parent=1 // pred_check
      _
    $region7: #{conv_block_forward.1} parent=1 // pred_check_branch
      %22 = sbr.rel (0) target = $region9
    $region8: #{conv_block_forward.1} parent=1 // pred_region
      _
    $region9: #{conv_block_forward.1} parent=1 // pred_fallthru
      _
    // Predicated region
    $region10: #{conv_block_forward.1} parent=1 // pred_check
      _
    $region11: #{conv_block_forward.1} parent=1 // pred_check_branch
      %24 = sbr.rel (0) target = $region13
    $region12: #{conv_block_forward.1} parent=1 // pred_region
      _
    $region13: #{conv_block_forward.1} parent=1 // pred_fallthru
      _
    // Predicated region
    $region14: #{conv_block_forward.1} parent=1 // pred_check
      _
    $region15: #{conv_block_forward.1} parent=1 // pred_check_branch
      %26 = sbr.rel (0) target = $region17
    $region16: #{conv_block_forward.1} parent=1 // pred_region
      _
    $region17: #{conv_block_forward.1} parent=1 // pred_fallthru
      _
    // Predicated region
    $region18: #{conv_block_forward.1} parent=1 // pred_check
      _
    $region19: #{conv_block_forward.1} parent=1 // pred_check_branch
      %28 = sbr.rel (0) target = $region21
    $region20: #{conv_block_forward.1} parent=1 // pred_region
      _
    $region21: #{conv_block_forward.1} parent=1 // pred_fallthru
      _
    // Predicated region
    $region22: #{conv_block_forward.1} parent=1 // pred_check
      _
    $region23: #{conv_block_forward.1} parent=1 // pred_check_branch
      %30 = sbr.rel (0) target = $region25
    $region24: #{conv_block_forward.1} parent=1 // pred_region
      _
    $region25: #{conv_block_forward.1} parent=1 // pred_fallthru
      _
    // Predicated region
    $region26: #{conv_block_forward.1} parent=1 // pred_check
      _
    $region27: #{conv_block_forward.1} parent=1 // pred_check_branch
      %32 = sbr.rel (0) target = $region29
    $region28: #{conv_block_forward.1} parent=1 // pred_region
      _
    $region29: #{conv_block_forward.1} parent=1 // pred_fallthru
      _
    // Predicated region
    $region30: #{conv_block_forward.1} parent=1 // pred_check
      _
    $region31: #{conv_block_forward.1} parent=1 // pred_check_branch
      %34 = sbr.rel (0) target = $region33
    $region32: #{conv_block_forward.1} parent=1 // pred_region
      _
    $region33: #{conv_block_forward.1} parent=1 // pred_fallthru
      _
    // Predicated region
    $region34: #{conv_block_forward.1} parent=1 // pred_check
      _
    $region35: #{conv_block_forward.1} parent=1 // pred_check_branch
      %36 = sbr.rel (0) target = $region37
    $region36: #{conv_block_forward.1} parent=1 // pred_region
      _
    $region37: #{conv_block_forward.1} parent=1 // pred_fallthru
      _
    // Predicated region
    $region38: #{conv_block_forward.1} parent=1 // pred_check
      _
    $region39: #{conv_block_forward.1} parent=1 // pred_check_branch
      %38 = sbr.rel (0) target = $region41
    $region40: #{conv_block_forward.1} parent=1 // pred_region
      _
    $region41: #{conv_block_forward.1} parent=1 // pred_fallthru
      _
    // Predicated region
    $region42: #{conv_block_forward.1} parent=1 // pred_check
      _
    $region43: #{conv_block_forward.1} parent=1 // pred_check_branch
      %40 = sbr.rel (0) target = $region45
    $region44: #{conv_block_forward.1} parent=1 // pred_region
      _
    $region45: #{conv_block_forward.1} parent=1 // pred_fallthru
      _
    // Predicated region
    $region46: #{conv_block_forward.1} parent=1 // pred_check
      _
    $region47: #{conv_block_forward.1} parent=1 // pred_check_branch
      %42 = sbr.rel (0) target = $region49
    $region48: #{conv_block_forward.1} parent=1 // pred_region
      _
    $region49: #{conv_block_forward.1} parent=1 // pred_fallthru
      _
    // Predicated region
    $region50: #{conv_block_forward.1} parent=1 // pred_check
      _
    $region51: #{conv_block_forward.1} parent=1 // pred_check_branch
      %44 = sbr.rel (0) target = $region53
    $region52: #{conv_block_forward.1} parent=1 // pred_region
      _
    $region53: #{conv_block_forward.1} parent=1 // pred_fallthru
      _
    %v45 = vld [vmem:[%s0] sm:$0x3]
    %46 = vst [vmem:[#allocation2] sm:$0x3] %v45
    %v47 = vld [vmem:[%s1] sm:$0xff]
    %v48 = vld [vmem:[%s1 + $0x8] sm:$0xff]
    %v49 = vld [vmem:[%s1 + $0x10] sm:$0xff]
    %v50 = vld [vmem:[%s1 + $0x18] sm:$0xff]
    %v51 = vld [vmem:[%s1 + $0x20] sm:$0xff]
    %v52 = vld [vmem:[%s1 + $0x28] sm:$0xff]
    %v53 = vld [vmem:[%s1 + $0x30] sm:$0xff]
    %v54 = vld [vmem:[%s1 + $0x38] sm:$0xff]
    %v55 = vld [vmem:[%s1 + $0x40] sm:$0xff]
    %v56 = vld [vmem:[%s1 + $0x48] sm:$0xff]
    %v57 = vld [vmem:[%s1 + $0x50] sm:$0xff]
    %v58 = vld [vmem:[%s1 + $0x58] sm:$0xff]
    %v59 = vld [vmem:[%s1 + $0x60] sm:$0xff]
    %v60 = vld [vmem:[%s1 + $0x68] sm:$0xff]
    %v61 = vld [vmem:[%s1 + $0x70] sm:$0xff]
    %v62 = vld [vmem:[%s1 + $0x78] sm:$0xff]
    %v63 = vld [vmem:[%s2] sm:$0x1]
    %v65 = vlaneseq
    %v66 = vshrl.u32 %v65, 7
    %v67 = vsub.s32 0, %v66
    %v68 = vrot.slane %v63, %v67
    %70 = vmatprep.subr.mxu0 0.0
    %71 = vmatpush1.msra.mxu0 %v62
    %72 = vmatprep.subr.mxu0 0.0
    %73 = vmatpush1.msra.mxu0 %v61
    %74 = vmatprep.subr.mxu0 0.0
    %75 = vmatpush1.msra.mxu0 %v60
    %76 = vmatprep.subr.mxu0 0.0
    %77 = vmatpush1.msra.mxu0 %v59
    %78 = vmatprep.subr.mxu0 0.0
    %79 = vmatpush1.msra.mxu0 %v58
    %80 = vmatprep.subr.mxu0 0.0
    %81 = vmatpush1.msra.mxu0 %v57
    %82 = vmatprep.subr.mxu0 0.0
    %83 = vmatpush1.msra.mxu0 %v56
    %84 = vmatprep.subr.mxu0 0.0
    %85 = vmatpush1.msra.mxu0 %v55
    %86 = vmatprep.subr.mxu0 0.0
    %87 = vmatpush1.msra.mxu0 %v54
    %88 = vmatprep.subr.mxu0 0.0
    %89 = vmatpush1.msra.mxu0 %v53
    %90 = vmatprep.subr.mxu0 0.0
    %91 = vmatpush1.msra.mxu0 %v52
    %92 = vmatprep.subr.mxu0 0.0
    %93 = vmatpush1.msra.mxu0 %v51
    %94 = vmatprep.subr.mxu0 0.0
    %95 = vmatpush1.msra.mxu0 %v50
    %96 = vmatprep.subr.mxu0 0.0
    %97 = vmatpush1.msra.mxu0 %v49
    %98 = vmatprep.subr.mxu0 0.0
    %99 = vmatpush1.msra.mxu0 %v48
    %100 = vmatprep.subr.mxu0 0.0
    %101 = vmatpush1.msra.mxu0 %v47
    %102 = vmatprep.subr.mxu0 0.0
    %103 = vmatpush2.msra.mxu0 0.0
    %104 = vmatprep.subr.mxu0 0.0
    %105 = vmatpush2.msra.mxu0 0.0
    %106 = vmatprep.subr.mxu0 0.0
    %107 = vmatpush2.msra.mxu0 0.0
    %108 = vmatprep.subr.mxu0 0.0
    %109 = vmatpush2.msra.mxu0 0.0
    %110 = vmatprep.subr.mxu0 0.0
    %111 = vmatpush2.msra.mxu0 0.0
    %112 = vmatprep.subr.mxu0 0.0
    %113 = vmatpush2.msra.mxu0 0.0
    %114 = vmatprep.subr.mxu0 0.0
    %115 = vmatpush2.msra.mxu0 0.0
    %116 = vmatprep.subr.mxu0 0.0
    %117 = vmatpush2.msra.mxu0 0.0
    %118 = vmatprep.subr.mxu0 0.0
    %119 = vmatpush2.msra.mxu0 0.0
    %120 = vmatprep.subr.mxu0 0.0
    %121 = vmatpush2.msra.mxu0 0.0
    %122 = vmatprep.subr.mxu0 0.0
    %123 = vmatpush2.msra.mxu0 0.0
    %124 = vmatprep.subr.mxu0 0.0
    %125 = vmatpush2.msra.mxu0 0.0
    %126 = vmatprep.subr.mxu0 0.0
    %127 = vmatpush2.msra.mxu0 0.0
    %128 = vmatprep.subr.mxu0 0.0
    %129 = vmatpush2.msra.mxu0 0.0
    %130 = vmatprep.subr.mxu0 0.0
    %131 = vmatpush2.msra.mxu0 0.0
    %132 = vmatprep.subr.mxu0 0.0
    %133 = vmatpush2.msra.mxu0 0.0
    %134 = vmatprep.mubr.f32.mxu0 0.0
    %135 = vmatmul.mubr.f32.gmra.mxu0 %v45
    %v136 = vpop.f32.mrf.mxu0
    %v137 = vadd.f32 %v68, %v136
    %v138 = vpop.f32.mrf.mxu0
    %139 = vdwg.mxu0
    %v140 = vmax.f32 %v137, 0.0
    %141 = vst [vmem:[#allocation2 + $0x2] sm:$0x3] %v140
    %v142 = vld [vmem:[%s3] sm:$0xff]
    %v143 = vld [vmem:[%s3 + $0x8] sm:$0xff]
    %v144 = vld [vmem:[%s3 + $0x10] sm:$0xff]
    %v145 = vld [vmem:[%s3 + $0x18] sm:$0xff]
    %v146 = vld [vmem:[%s3 + $0x20] sm:$0xff]
    %v147 = vld [vmem:[%s3 + $0x28] sm:$0xff]
    %v148 = vld [vmem:[%s3 + $0x30] sm:$0xff]
    %v149 = vld [vmem:[%s3 + $0x38] sm:$0xff]
    %v150 = vld [vmem:[%s3 + $0x40] sm:$0xff]
    %v151 = vld [vmem:[%s3 + $0x48] sm:$0xff]
    %v152 = vld [vmem:[%s3 + $0x50] sm:$0xff]
    %v153 = vld [vmem:[%s3 + $0x58] sm:$0xff]
    %v154 = vld [vmem:[%s3 + $0x60] sm:$0xff]
    %v155 = vld [vmem:[%s3 + $0x68] sm:$0xff]
    %v156 = vld [vmem:[%s3 + $0x70] sm:$0xff]
    %v157 = vld [vmem:[%s3 + $0x78] sm:$0xff]
    %v158 = vld [vmem:[%s3 + $0x80] sm:$0xff]
    %v159 = vld [vmem:[%s3 + $0x88] sm:$0xff]
    %v160 = vld [vmem:[%s3 + $0x90] sm:$0xff]
    %v161 = vld [vmem:[%s3 + $0x98] sm:$0xff]
    %v162 = vld [vmem:[%s3 + $0xa0] sm:$0xff]
    %v163 = vld [vmem:[%s3 + $0xa8] sm:$0xff]
    %v164 = vld [vmem:[%s3 + $0xb0] sm:$0xff]
    %v165 = vld [vmem:[%s3 + $0xb8] sm:$0xff]
    %v166 = vld [vmem:[%s3 + $0xc0] sm:$0xff]
    %v167 = vld [vmem:[%s3 + $0xc8] sm:$0xff]
    %v168 = vld [vmem:[%s3 + $0xd0] sm:$0xff]
    %v169 = vld [vmem:[%s3 + $0xd8] sm:$0xff]
    %v170 = vld [vmem:[%s3 + $0xe0] sm:$0xff]
    %v171 = vld [vmem:[%s3 + $0xe8] sm:$0xff]
    %v172 = vld [vmem:[%s3 + $0xf0] sm:$0xff]
    %v173 = vld [vmem:[%s3 + $0xf8] sm:$0xff]
    %v174 = vld [vmem:[%s3 + $0x100] sm:$0xff]
    %v175 = vld [vmem:[%s3 + $0x108] sm:$0xff]
    %v176 = vld [vmem:[%s3 + $0x110] sm:$0xff]
    %v177 = vld [vmem:[%s3 + $0x118] sm:$0xff]
    %v178 = vld [vmem:[%s3 + $0x120] sm:$0xff]
    %v179 = vld [vmem:[%s3 + $0x128] sm:$0xff]
    %v180 = vld [vmem:[%s3 + $0x130] sm:$0xff]
    %v181 = vld [vmem:[%s3 + $0x138] sm:$0xff]
    %v182 = vld [vmem:[%s3 + $0x140] sm:$0xff]
    %v183 = vld [vmem:[%s3 + $0x148] sm:$0xff]
    %v184 = vld [vmem:[%s3 + $0x150] sm:$0xff]
    %v185 = vld [vmem:[%s3 + $0x158] sm:$0xff]
    %v186 = vld [vmem:[%s3 + $0x160] sm:$0xff]
    %v187 = vld [vmem:[%s3 + $0x168] sm:$0xff]
    %v188 = vld [vmem:[%s3 + $0x170] sm:$0xff]
    %v189 = vld [vmem:[%s3 + $0x178] sm:$0xff]
    %v190 = vld [vmem:[%s4] sm:$0x7]
    %v192 = vlaneseq
    %v193 = vshrl.u32 %v192, 7
    %v194 = vsub.s32 0, %v193
    %v195 = vrot.slane %v190, %v194
    %v196 = vlaneseq
    %v197 = vshrl.u32 %v196, 7
    %v198 = vsub.s32 1, %v197
    %v199 = vrot.slane %v190, %v198
    %v200 = vlaneseq
    %v201 = vshrl.u32 %v200, 7
    %v202 = vsub.s32 2, %v201
    %v203 = vrot.slane %v190, %v202
    %207 = vmatprep.subr.mxu0 %v188
    %208 = vmatpush1.msra.mxu0 %v187
    %209 = vmatprep.subr.mxu0 %v185
    %210 = vmatpush1.msra.mxu0 %v184
    %211 = vmatprep.subr.mxu0 %v182
    %212 = vmatpush1.msra.mxu0 %v181
    %213 = vmatprep.subr.mxu0 %v179
    %214 = vmatpush1.msra.mxu0 %v178
    %215 = vmatprep.subr.mxu0 %v176
    %216 = vmatpush1.msra.mxu0 %v175
    %217 = vmatprep.subr.mxu0 %v173
    %218 = vmatpush1.msra.mxu0 %v172
    %219 = vmatprep.subr.mxu0 %v170
    %220 = vmatpush1.msra.mxu0 %v169
    %221 = vmatprep.subr.mxu0 %v167
    %222 = vmatpush1.msra.mxu0 %v166
    %223 = vmatprep.subr.mxu0 %v164
    %224 = vmatpush1.msra.mxu0 %v163
    %225 = vmatprep.subr.mxu0 %v161
    %226 = vmatpush1.msra.mxu0 %v160
    %227 = vmatprep.subr.mxu0 %v158
    %228 = vmatpush1.msra.mxu0 %v157
    %229 = vmatprep.subr.mxu0 %v155
    %230 = vmatpush1.msra.mxu0 %v154
    %231 = vmatprep.subr.mxu0 %v152
    %232 = vmatpush1.msra.mxu0 %v151
    %233 = vmatprep.subr.mxu0 %v149
    %234 = vmatpush1.msra.mxu0 %v148
    %235 = vmatprep.subr.mxu0 %v146
    %236 = vmatpush1.msra.mxu0 %v145
    %237 = vmatprep.subr.mxu0 %v143
    %238 = vmatpush1.msra.mxu0 %v142
    %239 = vmatprep.subr.mxu0 0.0
    %240 = vmatpush2.msra.mxu0 0.0
    %241 = vmatprep.subr.mxu0 0.0
    %242 = vmatpush2.msra.mxu0 0.0
    %243 = vmatprep.subr.mxu0 0.0
    %244 = vmatpush2.msra.mxu0 0.0
    %245 = vmatprep.subr.mxu0 0.0
    %246 = vmatpush2.msra.mxu0 0.0
    %247 = vmatprep.subr.mxu0 0.0
    %248 = vmatpush2.msra.mxu0 0.0
    %249 = vmatprep.subr.mxu0 0.0
    %250 = vmatpush2.msra.mxu0 0.0
    %251 = vmatprep.subr.mxu0 0.0
    %252 = vmatpush2.msra.mxu0 0.0
    %253 = vmatprep.subr.mxu0 0.0
    %254 = vmatpush2.msra.mxu0 0.0
    %255 = vmatprep.subr.mxu0 0.0
    %256 = vmatpush2.msra.mxu0 0.0
    %257 = vmatprep.subr.mxu0 0.0
    %258 = vmatpush2.msra.mxu0 0.0
    %259 = vmatprep.subr.mxu0 0.0
    %260 = vmatpush2.msra.mxu0 0.0
    %261 = vmatprep.subr.mxu0 0.0
    %262 = vmatpush2.msra.mxu0 0.0
    %263 = vmatprep.subr.mxu0 0.0
    %264 = vmatpush2.msra.mxu0 0.0
    %265 = vmatprep.subr.mxu0 0.0
    %266 = vmatpush2.msra.mxu0 0.0
    %267 = vmatprep.subr.mxu0 0.0
    %268 = vmatpush2.msra.mxu0 0.0
    %269 = vmatprep.subr.mxu0 0.0
    %270 = vmatpush2.msra.mxu0 0.0
    %271 = vmatprep.mubr.f32.mxu0 0.0
    %272 = vmatmul.mubr.f32.gmra.mxu0 %v45
    %v273 = vpop.f32.mrf.mxu0
    %v274 = vadd.f32 %v195, %v273
    %v275 = vpop.f32.mrf.mxu0
    %v276 = vadd.f32 %v199, %v275
    %277 = vdwg.mxu0
    %278 = vmatprep.subr.mxu0 0.0
    %279 = vmatpush1.msra.mxu0 %v189
    %280 = vmatprep.subr.mxu0 0.0
    %281 = vmatpush1.msra.mxu0 %v186
    %282 = vmatprep.subr.mxu0 0.0
    %283 = vmatpush1.msra.mxu0 %v183
    %284 = vmatprep.subr.mxu0 0.0
    %285 = vmatpush1.msra.mxu0 %v180
    %286 = vmatprep.subr.mxu0 0.0
    %287 = vmatpush1.msra.mxu0 %v177
    %288 = vmatprep.subr.mxu0 0.0
    %289 = vmatpush1.msra.mxu0 %v174
    %290 = vmatprep.subr.mxu0 0.0
    %291 = vmatpush1.msra.mxu0 %v171
    %292 = vmatprep.subr.mxu0 0.0
    %293 = vmatpush1.msra.mxu0 %v168
    %294 = vmatprep.subr.mxu0 0.0
    %295 = vmatpush1.msra.mxu0 %v165
    %296 = vmatprep.subr.mxu0 0.0
    %297 = vmatpush1.msra.mxu0 %v162
    %298 = vmatprep.subr.mxu0 0.0
    %299 = vmatpush1.msra.mxu0 %v159
    %300 = vmatprep.subr.mxu0 0.0
    %301 = vmatpush1.msra.mxu0 %v156
    %302 = vmatprep.subr.mxu0 0.0
    %303 = vmatpush1.msra.mxu0 %v153
    %304 = vmatprep.subr.mxu0 0.0
    %305 = vmatpush1.msra.mxu0 %v150
    %306 = vmatprep.subr.mxu0 0.0
    %307 = vmatpush1.msra.mxu0 %v147
    %308 = vmatprep.subr.mxu0 0.0
    %309 = vmatpush1.msra.mxu0 %v144
    %310 = vmatprep.subr.mxu0 0.0
    %311 = vmatpush2.msra.mxu0 0.0
    %312 = vmatprep.subr.mxu0 0.0
    %313 = vmatpush2.msra.mxu0 0.0
    %314 = vmatprep.subr.mxu0 0.0
    %315 = vmatpush2.msra.mxu0 0.0
    %316 = vmatprep.subr.mxu0 0.0
    %317 = vmatpush2.msra.mxu0 0.0
    %318 = vmatprep.subr.mxu0 0.0
    %319 = vmatpush2.msra.mxu0 0.0
    %320 = vmatprep.subr.mxu0 0.0
    %321 = vmatpush2.msra.mxu0 0.0
    %322 = vmatprep.subr.mxu0 0.0
    %323 = vmatpush2.msra.mxu0 0.0
    %324 = vmatprep.subr.mxu0 0.0
    %325 = vmatpush2.msra.mxu0 0.0
    %326 = vmatprep.subr.mxu0 0.0
    %327 = vmatpush2.msra.mxu0 0.0
    %328 = vmatprep.subr.mxu0 0.0
    %329 = vmatpush2.msra.mxu0 0.0
    %330 = vmatprep.subr.mxu0 0.0
    %331 = vmatpush2.msra.mxu0 0.0
    %332 = vmatprep.subr.mxu0 0.0
    %333 = vmatpush2.msra.mxu0 0.0
    %334 = vmatprep.subr.mxu0 0.0
    %335 = vmatpush2.msra.mxu0 0.0
    %336 = vmatprep.subr.mxu0 0.0
    %337 = vmatpush2.msra.mxu0 0.0
    %338 = vmatprep.subr.mxu0 0.0
    %339 = vmatpush2.msra.mxu0 0.0
    %340 = vmatprep.subr.mxu0 0.0
    %341 = vmatpush2.msra.mxu0 0.0
    %342 = vmatprep.mubr.f32.mxu0 0.0
    %343 = vmatmul.mubr.f32.gmra.mxu0 %v45
    %v344 = vpop.f32.mrf.mxu0
    %v345 = vadd.f32 %v203, %v344
    %v346 = vpop.f32.mrf.mxu0
    %347 = vdwg.mxu0
    %v348 = vmax.f32 %v274, 0.0
    %v349 = vmax.f32 %v276, 0.0
    %v350 = vmax.f32 %v345, 0.0
    %v351 = vld [vmem:[%s9] sm:$0xff]
    %v352 = vld [vmem:[%s9 + $0x8] sm:$0xff]
    %v353 = vld [vmem:[%s9 + $0x10] sm:$0xff]
    %v354 = vld [vmem:[%s9 + $0x18] sm:$0xff]
    %v355 = vld [vmem:[%s9 + $0x20] sm:$0xff]
    %v356 = vld [vmem:[%s9 + $0x28] sm:$0xff]
    %v357 = vld [vmem:[%s9 + $0x30] sm:$0xff]
    %v358 = vld [vmem:[%s9 + $0x38] sm:$0xff]
    %v359 = vld [vmem:[%s9 + $0x40] sm:$0xff]
    %v360 = vld [vmem:[%s9 + $0x48] sm:$0xff]
    %v361 = vld [vmem:[%s9 + $0x50] sm:$0xff]
    %v362 = vld [vmem:[%s9 + $0x58] sm:$0xff]
    %v363 = vld [vmem:[%s9 + $0x60] sm:$0xff]
    %v364 = vld [vmem:[%s9 + $0x68] sm:$0xff]
    %v365 = vld [vmem:[%s9 + $0x70] sm:$0xff]
    %v366 = vld [vmem:[%s9 + $0x78] sm:$0xff]
    %v367 = vld [vmem:[%s9 + $0x80] sm:$0xff]
    %v368 = vld [vmem:[%s9 + $0x88] sm:$0xff]
    %v369 = vld [vmem:[%s9 + $0x90] sm:$0xff]
    %v370 = vld [vmem:[%s9 + $0x98] sm:$0xff]
    %v371 = vld [vmem:[%s9 + $0xa0] sm:$0xff]
    %v372 = vld [vmem:[%s9 + $0xa8] sm:$0xff]
    %v373 = vld [vmem:[%s9 + $0xb0] sm:$0xff]
    %v374 = vld [vmem:[%s9 + $0xb8] sm:$0xff]
    %v375 = vld [vmem:[%s9 + $0xc0] sm:$0xff]
    %v376 = vld [vmem:[%s9 + $0xc8] sm:$0xff]
    %v377 = vld [vmem:[%s9 + $0xd0] sm:$0xff]
    %v378 = vld [vmem:[%s9 + $0xd8] sm:$0xff]
    %v379 = vld [vmem:[%s9 + $0xe0] sm:$0xff]
    %v380 = vld [vmem:[%s9 + $0xe8] sm:$0xff]
    %v381 = vld [vmem:[%s9 + $0xf0] sm:$0xff]
    %v382 = vld [vmem:[%s9 + $0xf8] sm:$0xff]
    %v383 = vld [vmem:[%s9 + $0x100] sm:$0xff]
    %v384 = vld [vmem:[%s9 + $0x108] sm:$0xff]
    %v385 = vld [vmem:[%s9 + $0x110] sm:$0xff]
    %v386 = vld [vmem:[%s9 + $0x118] sm:$0xff]
    %v387 = vld [vmem:[%s9 + $0x120] sm:$0xff]
    %v388 = vld [vmem:[%s9 + $0x128] sm:$0xff]
    %v389 = vld [vmem:[%s9 + $0x130] sm:$0xff]
    %v390 = vld [vmem:[%s9 + $0x138] sm:$0xff]
    %v391 = vld [vmem:[%s9 + $0x140] sm:$0xff]
    %v392 = vld [vmem:[%s9 + $0x148] sm:$0xff]
    %v393 = vld [vmem:[%s9 + $0x150] sm:$0xff]
    %v394 = vld [vmem:[%s9 + $0x158] sm:$0xff]
    %v395 = vld [vmem:[%s10] sm:$0x1]
    %v397 = vlaneseq
    %v398 = vshrl.u32 %v397, 7
    %v399 = vsub.s32 0, %v398
    %v400 = vrot.slane %v395, %v399
    %vm402 = vcmask 785408
    %v404 = vsel %vm402, %v350, 0
    %406 = vmatprep.subr.mxu0 0.0
    %407 = vmatpush1.msra.mxu0 %v366
    %408 = vmatprep.subr.mxu0 0.0
    %409 = vmatpush1.msra.mxu0 %v365
    %410 = vmatprep.subr.mxu0 0.0
    %411 = vmatpush1.msra.mxu0 %v364
    %412 = vmatprep.subr.mxu0 0.0
    %413 = vmatpush1.msra.mxu0 %v363
    %414 = vmatprep.subr.mxu0 0.0
    %415 = vmatpush1.msra.mxu0 %v362
    %416 = vmatprep.subr.mxu0 0.0
    %417 = vmatpush1.msra.mxu0 %v361
    %418 = vmatprep.subr.mxu0 0.0
    %419 = vmatpush1.msra.mxu0 %v360
    %420 = vmatprep.subr.mxu0 0.0
    %421 = vmatpush1.msra.mxu0 %v359
    %422 = vmatprep.subr.mxu0 0.0
    %423 = vmatpush1.msra.mxu0 %v358
    %424 = vmatprep.subr.mxu0 0.0
    %425 = vmatpush1.msra.mxu0 %v357
    %426 = vmatprep.subr.mxu0 0.0
    %427 = vmatpush1.msra.mxu0 %v356
    %428 = vmatprep.subr.mxu0 0.0
    %429 = vmatpush1.msra.mxu0 %v355
    %430 = vmatprep.subr.mxu0 0.0
    %431 = vmatpush1.msra.mxu0 %v354
    %432 = vmatprep.subr.mxu0 0.0
    %433 = vmatpush1.msra.mxu0 %v353
    %434 = vmatprep.subr.mxu0 0.0
    %435 = vmatpush1.msra.mxu0 %v352
    %436 = vmatprep.subr.mxu0 0.0
    %437 = vmatpush1.msra.mxu0 %v351
    %438 = vmatprep.subr.mxu0 0.0
    %439 = vmatpush2.msra.mxu0 %v382
    %440 = vmatprep.subr.mxu0 0.0
    %441 = vmatpush2.msra.mxu0 %v381
    %442 = vmatprep.subr.mxu0 0.0
    %443 = vmatpush2.msra.mxu0 %v380
    %444 = vmatprep.subr.mxu0 0.0
    %445 = vmatpush2.msra.mxu0 %v379
    %446 = vmatprep.subr.mxu0 0.0
    %447 = vmatpush2.msra.mxu0 %v378
    %448 = vmatprep.subr.mxu0 0.0
    %449 = vmatpush2.msra.mxu0 %v377
    %450 = vmatprep.subr.mxu0 0.0
    %451 = vmatpush2.msra.mxu0 %v376
    %452 = vmatprep.subr.mxu0 0.0
    %453 = vmatpush2.msra.mxu0 %v375
    %454 = vmatprep.subr.mxu0 0.0
    %455 = vmatpush2.msra.mxu0 %v374
    %456 = vmatprep.subr.mxu0 0.0
    %457 = vmatpush2.msra.mxu0 %v373
    %458 = vmatprep.subr.mxu0 0.0
    %459 = vmatpush2.msra.mxu0 %v372
    %460 = vmatprep.subr.mxu0 0.0
    %461 = vmatpush2.msra.mxu0 %v371
    %462 = vmatprep.subr.mxu0 0.0
    %463 = vmatpush2.msra.mxu0 %v370
    %464 = vmatprep.subr.mxu0 0.0
    %465 = vmatpush2.msra.mxu0 %v369
    %466 = vmatprep.subr.mxu0 0.0
    %467 = vmatpush2.msra.mxu0 %v368
    %468 = vmatprep.subr.mxu0 0.0
    %469 = vmatpush2.msra.mxu0 %v367
    %470 = vmatprep.mubr.f32.mxu0 %v349
    %471 = vmatmul.mubr.f32.gmra.mxu0 %v348
    %v472 = vpop.f32.mrf.mxu0
    %v473 = vadd.f32 %v400, %v472
    %v474 = vpop.f32.mrf.mxu0
    %475 = vdwg.mxu0
    %476 = vmatprep.subr.mxu0 0.0
    %477 = vmatpush1.msra.mxu0 0.0
    %478 = vmatprep.subr.mxu0 0.0
    %479 = vmatpush1.msra.mxu0 0.0
    %480 = vmatprep.subr.mxu0 0.0
    %481 = vmatpush1.msra.mxu0 0.0
    %482 = vmatprep.subr.mxu0 0.0
    %483 = vmatpush1.msra.mxu0 0.0
    %484 = vmatprep.subr.mxu0 0.0
    %485 = vmatpush1.msra.mxu0 %v394
    %486 = vmatprep.subr.mxu0 0.0
    %487 = vmatpush1.msra.mxu0 %v393
    %488 = vmatprep.subr.mxu0 0.0
    %489 = vmatpush1.msra.mxu0 %v392
    %490 = vmatprep.subr.mxu0 0.0
    %491 = vmatpush1.msra.mxu0 %v391
    %492 = vmatprep.subr.mxu0 0.0
    %493 = vmatpush1.msra.mxu0 %v390
    %494 = vmatprep.subr.mxu0 0.0
    %495 = vmatpush1.msra.mxu0 %v389
    %496 = vmatprep.subr.mxu0 0.0
    %497 = vmatpush1.msra.mxu0 %v388
    %498 = vmatprep.subr.mxu0 0.0
    %499 = vmatpush1.msra.mxu0 %v387
    %500 = vmatprep.subr.mxu0 0.0
    %501 = vmatpush1.msra.mxu0 %v386
    %502 = vmatprep.subr.mxu0 0.0
    %503 = vmatpush1.msra.mxu0 %v385
    %504 = vmatprep.subr.mxu0 0.0
    %505 = vmatpush1.msra.mxu0 %v384
    %506 = vmatprep.subr.mxu0 0.0
    %507 = vmatpush1.msra.mxu0 %v383
    %508 = vmatprep.subr.mxu0 0.0
    %509 = vmatpush2.msra.mxu0 0.0
    %510 = vmatprep.subr.mxu0 0.0
    %511 = vmatpush2.msra.mxu0 0.0
    %512 = vmatprep.subr.mxu0 0.0
    %513 = vmatpush2.msra.mxu0 0.0
    %514 = vmatprep.subr.mxu0 0.0
    %515 = vmatpush2.msra.mxu0 0.0
    %516 = vmatprep.subr.mxu0 0.0
    %517 = vmatpush2.msra.mxu0 0.0
    %518 = vmatprep.subr.mxu0 0.0
    %519 = vmatpush2.msra.mxu0 0.0
    %520 = vmatprep.subr.mxu0 0.0
    %521 = vmatpush2.msra.mxu0 0.0
    %522 = vmatprep.subr.mxu0 0.0
    %523 = vmatpush2.msra.mxu0 0.0
    %524 = vmatprep.subr.mxu0 0.0
    %525 = vmatpush2.msra.mxu0 0.0
    %526 = vmatprep.subr.mxu0 0.0
    %527 = vmatpush2.msra.mxu0 0.0
    %528 = vmatprep.subr.mxu0 0.0
    %529 = vmatpush2.msra.mxu0 0.0
    %530 = vmatprep.subr.mxu0 0.0
    %531 = vmatpush2.msra.mxu0 0.0
    %532 = vmatprep.subr.mxu0 0.0
    %533 = vmatpush2.msra.mxu0 0.0
    %534 = vmatprep.subr.mxu0 0.0
    %535 = vmatpush2.msra.mxu0 0.0
    %536 = vmatprep.subr.mxu0 0.0
    %537 = vmatpush2.msra.mxu0 0.0
    %538 = vmatprep.subr.mxu0 0.0
    %539 = vmatpush2.msra.mxu0 0.0
    %540 = vmatprep.mubr.f32.mxu0 0.0
    %541 = vmatmul.mubr.f32.gmra.mxu0 %v404
    %v542 = vpop.f32.mrf.mxu0
    %v543 = vadd.f32 %v473, %v542
    %v544 = vpop.f32.mrf.mxu0
    %545 = vdwg.mxu0
    %v546 = vmax.f32 %v543, 0.0
    %vm547 = vcmask 648192
    %548 = vst.msk [vmem:[#allocation2 + $0x4] sm:$0x3] %vm547, %v546
    %v549 = vld [vmem:[%s5] sm:$0xff]
    %v550 = vld [vmem:[%s5 + $0x8] sm:$0xff]
    %v551 = vld [vmem:[%s5 + $0x10] sm:$0xff]
    %v552 = vld [vmem:[%s5 + $0x18] sm:$0xff]
    %v553 = vld [vmem:[%s5 + $0x20] sm:$0xff]
    %v554 = vld [vmem:[%s5 + $0x28] sm:$0xff]
    %v555 = vld [vmem:[%s5 + $0x30] sm:$0xff]
    %v556 = vld [vmem:[%s5 + $0x38] sm:$0xff]
    %v557 = vld [vmem:[%s5 + $0x40] sm:$0xff]
    %v558 = vld [vmem:[%s5 + $0x48] sm:$0xff]
    %v559 = vld [vmem:[%s5 + $0x50] sm:$0xff]
    %v560 = vld [vmem:[%s5 + $0x58] sm:$0xff]
    %v561 = vld [vmem:[%s5 + $0x60] sm:$0xff]
    %v562 = vld [vmem:[%s5 + $0x68] sm:$0xff]
    %v563 = vld [vmem:[%s5 + $0x70] sm:$0xff]
    %v564 = vld [vmem:[%s5 + $0x78] sm:$0xff]
    %v565 = vld [vmem:[%s5 + $0x80] sm:$0xff]
    %v566 = vld [vmem:[%s5 + $0x88] sm:$0xff]
    %v567 = vld [vmem:[%s5 + $0x90] sm:$0xff]
    %v568 = vld [vmem:[%s5 + $0x98] sm:$0xff]
    %v569 = vld [vmem:[%s5 + $0xa0] sm:$0xff]
    %v570 = vld [vmem:[%s5 + $0xa8] sm:$0xff]
    %v571 = vld [vmem:[%s5 + $0xb0] sm:$0xff]
    %v572 = vld [vmem:[%s5 + $0xb8] sm:$0xff]
    %v573 = vld [vmem:[%s5 + $0xc0] sm:$0xff]
    %v574 = vld [vmem:[%s5 + $0xc8] sm:$0xff]
    %v575 = vld [vmem:[%s5 + $0xd0] sm:$0xff]
    %v576 = vld [vmem:[%s5 + $0xd8] sm:$0xff]
    %v577 = vld [vmem:[%s5 + $0xe0] sm:$0xff]
    %v578 = vld [vmem:[%s5 + $0xe8] sm:$0xff]
    %v579 = vld [vmem:[%s5 + $0xf0] sm:$0xff]
    %v580 = vld [vmem:[%s5 + $0xf8] sm:$0xff]
    %v581 = vld [vmem:[%s5 + $0x100] sm:$0xff]
    %v582 = vld [vmem:[%s5 + $0x108] sm:$0xff]
    %v583 = vld [vmem:[%s5 + $0x110] sm:$0xff]
    %v584 = vld [vmem:[%s5 + $0x118] sm:$0xff]
    %v585 = vld [vmem:[%s5 + $0x120] sm:$0xff]
    %v586 = vld [vmem:[%s5 + $0x128] sm:$0xff]
    %v587 = vld [vmem:[%s5 + $0x130] sm:$0xff]
    %v588 = vld [vmem:[%s5 + $0x138] sm:$0xff]
    %v589 = vld [vmem:[%s5 + $0x140] sm:$0xff]
    %v590 = vld [vmem:[%s5 + $0x148] sm:$0xff]
    %v591 = vld [vmem:[%s5 + $0x150] sm:$0xff]
    %v592 = vld [vmem:[%s5 + $0x158] sm:$0xff]
    %v593 = vld [vmem:[%s5 + $0x160] sm:$0xff]
    %v594 = vld [vmem:[%s5 + $0x168] sm:$0xff]
    %v595 = vld [vmem:[%s5 + $0x170] sm:$0xff]
    %v596 = vld [vmem:[%s5 + $0x178] sm:$0xff]
    %v597 = vld [vmem:[%s6] sm:$0x7]
    %v599 = vlaneseq
    %v600 = vshrl.u32 %v599, 7
    %v601 = vsub.s32 0, %v600
    %v602 = vrot.slane %v597, %v601
    %v603 = vlaneseq
    %v604 = vshrl.u32 %v603, 7
    %v605 = vsub.s32 1, %v604
    %v606 = vrot.slane %v597, %v605
    %v607 = vlaneseq
    %v608 = vshrl.u32 %v607, 7
    %v609 = vsub.s32 2, %v608
    %v610 = vrot.slane %v597, %v609
    %614 = vmatprep.subr.mxu0 %v595
    %615 = vmatpush1.msra.mxu0 %v594
    %616 = vmatprep.subr.mxu0 %v592
    %617 = vmatpush1.msra.mxu0 %v591
    %618 = vmatprep.subr.mxu0 %v589
    %619 = vmatpush1.msra.mxu0 %v588
    %620 = vmatprep.subr.mxu0 %v586
    %621 = vmatpush1.msra.mxu0 %v585
    %622 = vmatprep.subr.mxu0 %v583
    %623 = vmatpush1.msra.mxu0 %v582
    %624 = vmatprep.subr.mxu0 %v580
    %625 = vmatpush1.msra.mxu0 %v579
    %626 = vmatprep.subr.mxu0 %v577
    %627 = vmatpush1.msra.mxu0 %v576
    %628 = vmatprep.subr.mxu0 %v574
    %629 = vmatpush1.msra.mxu0 %v573
    %630 = vmatprep.subr.mxu0 %v571
    %631 = vmatpush1.msra.mxu0 %v570
    %632 = vmatprep.subr.mxu0 %v568
    %633 = vmatpush1.msra.mxu0 %v567
    %634 = vmatprep.subr.mxu0 %v565
    %635 = vmatpush1.msra.mxu0 %v564
    %636 = vmatprep.subr.mxu0 %v562
    %637 = vmatpush1.msra.mxu0 %v561
    %638 = vmatprep.subr.mxu0 %v559
    %639 = vmatpush1.msra.mxu0 %v558
    %640 = vmatprep.subr.mxu0 %v556
    %641 = vmatpush1.msra.mxu0 %v555
    %642 = vmatprep.subr.mxu0 %v553
    %643 = vmatpush1.msra.mxu0 %v552
    %644 = vmatprep.subr.mxu0 %v550
    %645 = vmatpush1.msra.mxu0 %v549
    %646 = vmatprep.subr.mxu0 0.0
    %647 = vmatpush2.msra.mxu0 0.0
    %648 = vmatprep.subr.mxu0 0.0
    %649 = vmatpush2.msra.mxu0 0.0
    %650 = vmatprep.subr.mxu0 0.0
    %651 = vmatpush2.msra.mxu0 0.0
    %652 = vmatprep.subr.mxu0 0.0
    %653 = vmatpush2.msra.mxu0 0.0
    %654 = vmatprep.subr.mxu0 0.0
    %655 = vmatpush2.msra.mxu0 0.0
    %656 = vmatprep.subr.mxu0 0.0
    %657 = vmatpush2.msra.mxu0 0.0
    %658 = vmatprep.subr.mxu0 0.0
    %659 = vmatpush2.msra.mxu0 0.0
    %660 = vmatprep.subr.mxu0 0.0
    %661 = vmatpush2.msra.mxu0 0.0
    %662 = vmatprep.subr.mxu0 0.0
    %663 = vmatpush2.msra.mxu0 0.0
    %664 = vmatprep.subr.mxu0 0.0
    %665 = vmatpush2.msra.mxu0 0.0
    %666 = vmatprep.subr.mxu0 0.0
    %667 = vmatpush2.msra.mxu0 0.0
    %668 = vmatprep.subr.mxu0 0.0
    %669 = vmatpush2.msra.mxu0 0.0
    %670 = vmatprep.subr.mxu0 0.0
    %671 = vmatpush2.msra.mxu0 0.0
    %672 = vmatprep.subr.mxu0 0.0
    %673 = vmatpush2.msra.mxu0 0.0
    %674 = vmatprep.subr.mxu0 0.0
    %675 = vmatpush2.msra.mxu0 0.0
    %676 = vmatprep.subr.mxu0 0.0
    %677 = vmatpush2.msra.mxu0 0.0
    %678 = vmatprep.mubr.f32.mxu0 0.0
    %679 = vmatmul.mubr.f32.gmra.mxu0 %v45
    %v680 = vpop.f32.mrf.mxu0
    %v681 = vadd.f32 %v602, %v680
    %v682 = vpop.f32.mrf.mxu0
    %v683 = vadd.f32 %v606, %v682
    %684 = vdwg.mxu0
    %685 = vmatprep.subr.mxu0 0.0
    %686 = vmatpush1.msra.mxu0 %v596
    %687 = vmatprep.subr.mxu0 0.0
    %688 = vmatpush1.msra.mxu0 %v593
    %689 = vmatprep.subr.mxu0 0.0
    %690 = vmatpush1.msra.mxu0 %v590
    %691 = vmatprep.subr.mxu0 0.0
    %692 = vmatpush1.msra.mxu0 %v587
    %693 = vmatprep.subr.mxu0 0.0
    %694 = vmatpush1.msra.mxu0 %v584
    %695 = vmatprep.subr.mxu0 0.0
    %696 = vmatpush1.msra.mxu0 %v581
    %697 = vmatprep.subr.mxu0 0.0
    %698 = vmatpush1.msra.mxu0 %v578
    %699 = vmatprep.subr.mxu0 0.0
    %700 = vmatpush1.msra.mxu0 %v575
    %701 = vmatprep.subr.mxu0 0.0
    %702 = vmatpush1.msra.mxu0 %v572
    %703 = vmatprep.subr.mxu0 0.0
    %704 = vmatpush1.msra.mxu0 %v569
    %705 = vmatprep.subr.mxu0 0.0
    %706 = vmatpush1.msra.mxu0 %v566
    %707 = vmatprep.subr.mxu0 0.0
    %708 = vmatpush1.msra.mxu0 %v563
    %709 = vmatprep.subr.mxu0 0.0
    %710 = vmatpush1.msra.mxu0 %v560
    %711 = vmatprep.subr.mxu0 0.0
    %712 = vmatpush1.msra.mxu0 %v557
    %713 = vmatprep.subr.mxu0 0.0
    %714 = vmatpush1.msra.mxu0 %v554
    %715 = vmatprep.subr.mxu0 0.0
    %716 = vmatpush1.msra.mxu0 %v551
    %717 = vmatprep.subr.mxu0 0.0
    %718 = vmatpush2.msra.mxu0 0.0
    %719 = vmatprep.subr.mxu0 0.0
    %720 = vmatpush2.msra.mxu0 0.0
    %721 = vmatprep.subr.mxu0 0.0
    %722 = vmatpush2.msra.mxu0 0.0
    %723 = vmatprep.subr.mxu0 0.0
    %724 = vmatpush2.msra.mxu0 0.0
    %725 = vmatprep.subr.mxu0 0.0
    %726 = vmatpush2.msra.mxu0 0.0
    %727 = vmatprep.subr.mxu0 0.0
    %728 = vmatpush2.msra.mxu0 0.0
    %729 = vmatprep.subr.mxu0 0.0
    %730 = vmatpush2.msra.mxu0 0.0
    %731 = vmatprep.subr.mxu0 0.0
    %732 = vmatpush2.msra.mxu0 0.0
    %733 = vmatprep.subr.mxu0 0.0
    %734 = vmatpush2.msra.mxu0 0.0
    %735 = vmatprep.subr.mxu0 0.0
    %736 = vmatpush2.msra.mxu0 0.0
    %737 = vmatprep.subr.mxu0 0.0
    %738 = vmatpush2.msra.mxu0 0.0
    %739 = vmatprep.subr.mxu0 0.0
    %740 = vmatpush2.msra.mxu0 0.0
    %741 = vmatprep.subr.mxu0 0.0
    %742 = vmatpush2.msra.mxu0 0.0
    %743 = vmatprep.subr.mxu0 0.0
    %744 = vmatpush2.msra.mxu0 0.0
    %745 = vmatprep.subr.mxu0 0.0
    %746 = vmatpush2.msra.mxu0 0.0
    %747 = vmatprep.subr.mxu0 0.0
    %748 = vmatpush2.msra.mxu0 0.0
    %749 = vmatprep.mubr.f32.mxu0 0.0
    %750 = vmatmul.mubr.f32.gmra.mxu0 %v45
    %v751 = vpop.f32.mrf.mxu0
    %v752 = vadd.f32 %v610, %v751
    %v753 = vpop.f32.mrf.mxu0
    %754 = vdwg.mxu0
    %v755 = vld [vmem:[%s7] sm:$0xff]
    %v756 = vld [vmem:[%s7 + $0x8] sm:$0xff]
    %v757 = vld [vmem:[%s7 + $0x10] sm:$0xff]
    %v758 = vld [vmem:[%s7 + $0x18] sm:$0xff]
    %v759 = vld [vmem:[%s7 + $0x20] sm:$0xff]
    %v760 = vld [vmem:[%s7 + $0x28] sm:$0xff]
    %v761 = vld [vmem:[%s7 + $0x30] sm:$0xff]
    %v762 = vld [vmem:[%s7 + $0x38] sm:$0xff]
    %v763 = vld [vmem:[%s7 + $0x40] sm:$0xff]
    %v764 = vld [vmem:[%s7 + $0x48] sm:$0xff]
    %v765 = vld [vmem:[%s7 + $0x50] sm:$0xff]
    %v766 = vld [vmem:[%s7 + $0x58] sm:$0xff]
    %v767 = vld [vmem:[%s7 + $0x60] sm:$0xff]
    %v768 = vld [vmem:[%s7 + $0x68] sm:$0xff]
    %v769 = vld [vmem:[%s7 + $0x70] sm:$0xff]
    %v770 = vld [vmem:[%s7 + $0x78] sm:$0xff]
    %v771 = vld [vmem:[%s7 + $0x80] sm:$0xff]
    %v772 = vld [vmem:[%s7 + $0x88] sm:$0xff]
    %v773 = vld [vmem:[%s7 + $0x90] sm:$0xff]
    %v774 = vld [vmem:[%s7 + $0x98] sm:$0xff]
    %v775 = vld [vmem:[%s7 + $0xa0] sm:$0xff]
    %v776 = vld [vmem:[%s7 + $0xa8] sm:$0xff]
    %v777 = vld [vmem:[%s7 + $0xb0] sm:$0xff]
    %v778 = vld [vmem:[%s7 + $0xb8] sm:$0xff]
    %v779 = vld [vmem:[%s7 + $0xc0] sm:$0xff]
    %v780 = vld [vmem:[%s7 + $0xc8] sm:$0xff]
    %v781 = vld [vmem:[%s7 + $0xd0] sm:$0xff]
    %v782 = vld [vmem:[%s7 + $0xd8] sm:$0xff]
    %v783 = vld [vmem:[%s7 + $0xe0] sm:$0xff]
    %v784 = vld [vmem:[%s7 + $0xe8] sm:$0xff]
    %v785 = vld [vmem:[%s7 + $0xf0] sm:$0xff]
    %v786 = vld [vmem:[%s7 + $0xf8] sm:$0xff]
    %v787 = vld [vmem:[%s7 + $0x100] sm:$0xff]
    %v788 = vld [vmem:[%s7 + $0x108] sm:$0xff]
    %v789 = vld [vmem:[%s7 + $0x110] sm:$0xff]
    %v790 = vld [vmem:[%s7 + $0x118] sm:$0xff]
    %v791 = vld [vmem:[%s7 + $0x120] sm:$0xff]
    %v792 = vld [vmem:[%s7 + $0x128] sm:$0xff]
    %v793 = vld [vmem:[%s7 + $0x130] sm:$0xff]
    %v794 = vld [vmem:[%s7 + $0x138] sm:$0xff]
    %v795 = vld [vmem:[%s7 + $0x140] sm:$0xff]
    %v796 = vld [vmem:[%s7 + $0x148] sm:$0xff]
    %v797 = vld [vmem:[%s7 + $0x150] sm:$0xff]
    %v798 = vld [vmem:[%s7 + $0x158] sm:$0xff]
    %v799 = vld [vmem:[%s7 + $0x160] sm:$0xff]
    %v800 = vld [vmem:[%s7 + $0x168] sm:$0xff]
    %v801 = vld [vmem:[%s7 + $0x170] sm:$0xff]
    %v802 = vld [vmem:[%s7 + $0x178] sm:$0xff]
    %v803 = vld [vmem:[%s7 + $0x180] sm:$0xff]
    %v804 = vld [vmem:[%s7 + $0x188] sm:$0xff]
    %v805 = vld [vmem:[%s7 + $0x190] sm:$0xff]
    %v806 = vld [vmem:[%s7 + $0x198] sm:$0xff]
    %v807 = vld [vmem:[%s7 + $0x1a0] sm:$0xff]
    %v808 = vld [vmem:[%s7 + $0x1a8] sm:$0xff]
    %v809 = vld [vmem:[%s7 + $0x1b0] sm:$0xff]
    %v810 = vld [vmem:[%s7 + $0x1b8] sm:$0xff]
    %v811 = vld [vmem:[%s7 + $0x1c0] sm:$0xff]
    %v812 = vld [vmem:[%s7 + $0x1c8] sm:$0xff]
    %v813 = vld [vmem:[%s7 + $0x1d0] sm:$0xff]
    %v814 = vld [vmem:[%s7 + $0x1d8] sm:$0xff]
    %v815 = vld [vmem:[%s7 + $0x1e0] sm:$0xff]
    %v816 = vld [vmem:[%s7 + $0x1e8] sm:$0xff]
    %v817 = vld [vmem:[%s7 + $0x1f0] sm:$0xff]
    %v818 = vld [vmem:[%s7 + $0x1f8] sm:$0xff]
    %v819 = vld [vmem:[%s7 + $0x200] sm:$0xff]
    %v820 = vld [vmem:[%s7 + $0x208] sm:$0xff]
    %v821 = vld [vmem:[%s7 + $0x210] sm:$0xff]
    %v822 = vld [vmem:[%s7 + $0x218] sm:$0xff]
    %v823 = vld [vmem:[%s7 + $0x220] sm:$0xff]
    %v824 = vld [vmem:[%s7 + $0x228] sm:$0xff]
    %v825 = vld [vmem:[%s7 + $0x230] sm:$0xff]
    %v826 = vld [vmem:[%s7 + $0x238] sm:$0xff]
    %v827 = vld [vmem:[%s7 + $0x240] sm:$0xff]
    %v828 = vld [vmem:[%s7 + $0x248] sm:$0xff]
    %v829 = vld [vmem:[%s7 + $0x250] sm:$0xff]
    %v830 = vld [vmem:[%s7 + $0x258] sm:$0xff]
    %v831 = vld [vmem:[%s7 + $0x260] sm:$0xff]
    %v832 = vld [vmem:[%s7 + $0x268] sm:$0xff]
    %v833 = vld [vmem:[%s7 + $0x270] sm:$0xff]
    %v834 = vld [vmem:[%s7 + $0x278] sm:$0xff]
    %v835 = vld [vmem:[%s7 + $0x280] sm:$0xff]
    %v836 = vld [vmem:[%s7 + $0x288] sm:$0xff]
    %v837 = vld [vmem:[%s7 + $0x290] sm:$0xff]
    %v838 = vld [vmem:[%s7 + $0x298] sm:$0xff]
    %v839 = vld [vmem:[%s7 + $0x2a0] sm:$0xff]
    %v840 = vld [vmem:[%s7 + $0x2a8] sm:$0xff]
    %v841 = vld [vmem:[%s7 + $0x2b0] sm:$0xff]
    %v842 = vld [vmem:[%s7 + $0x2b8] sm:$0xff]
    %v843 = vld [vmem:[%s8] sm:$0x3]
    %v845 = vlaneseq
    %v846 = vshrl.u32 %v845, 7
    %v847 = vsub.s32 0, %v846
    %v848 = vrot.slane %v843, %v847
    %v849 = vlaneseq
    %v850 = vshrl.u32 %v849, 7
    %v851 = vsub.s32 1, %v850
    %v852 = vrot.slane %v843, %v851
    %v856 = vsel %vm402, %v752, 0
    %858 = vmatprep.subr.mxu0 %v786
    %859 = vmatpush1.msra.mxu0 %v785
    %860 = vmatprep.subr.mxu0 %v784
    %861 = vmatpush1.msra.mxu0 %v783
    %862 = vmatprep.subr.mxu0 %v782
    %863 = vmatpush1.msra.mxu0 %v781
    %864 = vmatprep.subr.mxu0 %v780
    %865 = vmatpush1.msra.mxu0 %v779
    %866 = vmatprep.subr.mxu0 %v778
    %867 = vmatpush1.msra.mxu0 %v777
    %868 = vmatprep.subr.mxu0 %v776
    %869 = vmatpush1.msra.mxu0 %v775
    %870 = vmatprep.subr.mxu0 %v774
    %871 = vmatpush1.msra.mxu0 %v773
    %872 = vmatprep.subr.mxu0 %v772
    %873 = vmatpush1.msra.mxu0 %v771
    %874 = vmatprep.subr.mxu0 %v770
    %875 = vmatpush1.msra.mxu0 %v769
    %876 = vmatprep.subr.mxu0 %v768
    %877 = vmatpush1.msra.mxu0 %v767
    %878 = vmatprep.subr.mxu0 %v766
    %879 = vmatpush1.msra.mxu0 %v765
    %880 = vmatprep.subr.mxu0 %v764
    %881 = vmatpush1.msra.mxu0 %v763
    %882 = vmatprep.subr.mxu0 %v762
    %883 = vmatpush1.msra.mxu0 %v761
    %884 = vmatprep.subr.mxu0 %v760
    %885 = vmatpush1.msra.mxu0 %v759
    %886 = vmatprep.subr.mxu0 %v758
    %887 = vmatpush1.msra.mxu0 %v757
    %888 = vmatprep.subr.mxu0 %v756
    %889 = vmatpush1.msra.mxu0 %v755
    %890 = vmatprep.subr.mxu0 %v818
    %891 = vmatpush2.msra.mxu0 %v817
    %892 = vmatprep.subr.mxu0 %v816
    %893 = vmatpush2.msra.mxu0 %v815
    %894 = vmatprep.subr.mxu0 %v814
    %895 = vmatpush2.msra.mxu0 %v813
    %896 = vmatprep.subr.mxu0 %v812
    %897 = vmatpush2.msra.mxu0 %v811
    %898 = vmatprep.subr.mxu0 %v810
    %899 = vmatpush2.msra.mxu0 %v809
    %900 = vmatprep.subr.mxu0 %v808
    %901 = vmatpush2.msra.mxu0 %v807
    %902 = vmatprep.subr.mxu0 %v806
    %903 = vmatpush2.msra.mxu0 %v805
    %904 = vmatprep.subr.mxu0 %v804
    %905 = vmatpush2.msra.mxu0 %v803
    %906 = vmatprep.subr.mxu0 %v802
    %907 = vmatpush2.msra.mxu0 %v801
    %908 = vmatprep.subr.mxu0 %v800
    %909 = vmatpush2.msra.mxu0 %v799
    %910 = vmatprep.subr.mxu0 %v798
    %911 = vmatpush2.msra.mxu0 %v797
    %912 = vmatprep.subr.mxu0 %v796
    %913 = vmatpush2.msra.mxu0 %v795
    %914 = vmatprep.subr.mxu0 %v794
    %915 = vmatpush2.msra.mxu0 %v793
    %916 = vmatprep.subr.mxu0 %v792
    %917 = vmatpush2.msra.mxu0 %v791
    %918 = vmatprep.subr.mxu0 %v790
    %919 = vmatpush2.msra.mxu0 %v789
    %920 = vmatprep.subr.mxu0 %v788
    %921 = vmatpush2.msra.mxu0 %v787
    %922 = vmatprep.mubr.f32.mxu0 %v683
    %923 = vmatmul.mubr.f32.gmra.mxu0 %v681
    %v924 = vpop.f32.mrf.mxu0
    %v925 = vadd.f32 %v848, %v924
    %v926 = vpop.f32.mrf.mxu0
    %v927 = vadd.f32 %v852, %v926
    %928 = vdwg.mxu0
    %929 = vmatprep.subr.mxu0 0.0
    %930 = vmatpush1.msra.mxu0 0.0
    %931 = vmatprep.subr.mxu0 0.0
    %932 = vmatpush1.msra.mxu0 0.0
    %933 = vmatprep.subr.mxu0 0.0
    %934 = vmatpush1.msra.mxu0 0.0
    %935 = vmatprep.subr.mxu0 0.0
    %936 = vmatpush1.msra.mxu0 0.0
    %937 = vmatprep.subr.mxu0 %v842
    %938 = vmatpush1.msra.mxu0 %v841
    %939 = vmatprep.subr.mxu0 %v840
    %940 = vmatpush1.msra.mxu0 %v839
    %941 = vmatprep.subr.mxu0 %v838
    %942 = vmatpush1.msra.mxu0 %v837
    %943 = vmatprep.subr.mxu0 %v836
    %944 = vmatpush1.msra.mxu0 %v835
    %945 = vmatprep.subr.mxu0 %v834
    %946 = vmatpush1.msra.mxu0 %v833
    %947 = vmatprep.subr.mxu0 %v832
    %948 = vmatpush1.msra.mxu0 %v831
    %949 = vmatprep.subr.mxu0 %v830
    %950 = vmatpush1.msra.mxu0 %v829
    %951 = vmatprep.subr.mxu0 %v828
    %952 = vmatpush1.msra.mxu0 %v827
    %953 = vmatprep.subr.mxu0 %v826
    %954 = vmatpush1.msra.mxu0 %v825
    %955 = vmatprep.subr.mxu0 %v824
    %956 = vmatpush1.msra.mxu0 %v823
    %957 = vmatprep.subr.mxu0 %v822
    %958 = vmatpush1.msra.mxu0 %v821
    %959 = vmatprep.subr.mxu0 %v820
    %960 = vmatpush1.msra.mxu0 %v819
    %961 = vmatprep.subr.mxu0 0.0
    %962 = vmatpush2.msra.mxu0 0.0
    %963 = vmatprep.subr.mxu0 0.0
    %964 = vmatpush2.msra.mxu0 0.0
    %965 = vmatprep.subr.mxu0 0.0
    %966 = vmatpush2.msra.mxu0 0.0
    %967 = vmatprep.subr.mxu0 0.0
    %968 = vmatpush2.msra.mxu0 0.0
    %969 = vmatprep.subr.mxu0 0.0
    %970 = vmatpush2.msra.mxu0 0.0
    %971 = vmatprep.subr.mxu0 0.0
    %972 = vmatpush2.msra.mxu0 0.0
    %973 = vmatprep.subr.mxu0 0.0
    %974 = vmatpush2.msra.mxu0 0.0
    %975 = vmatprep.subr.mxu0 0.0
    %976 = vmatpush2.msra.mxu0 0.0
    %977 = vmatprep.subr.mxu0 0.0
    %978 = vmatpush2.msra.mxu0 0.0
    %979 = vmatprep.subr.mxu0 0.0
    %980 = vmatpush2.msra.mxu0 0.0
    %981 = vmatprep.subr.mxu0 0.0
    %982 = vmatpush2.msra.mxu0 0.0
    %983 = vmatprep.subr.mxu0 0.0
    %984 = vmatpush2.msra.mxu0 0.0
    %985 = vmatprep.subr.mxu0 0.0
    %986 = vmatpush2.msra.mxu0 0.0
    %987 = vmatprep.subr.mxu0 0.0
    %988 = vmatpush2.msra.mxu0 0.0
    %989 = vmatprep.subr.mxu0 0.0
    %990 = vmatpush2.msra.mxu0 0.0
    %991 = vmatprep.subr.mxu0 0.0
    %992 = vmatpush2.msra.mxu0 0.0
    %993 = vmatprep.mubr.f32.mxu0 0.0
    %994 = vmatmul.mubr.f32.gmra.mxu0 %v856
    %v995 = vpop.f32.mrf.mxu0
    %v996 = vadd.f32 %v925, %v995
    %v997 = vpop.f32.mrf.mxu0
    %v998 = vadd.f32 %v927, %v997
    %999 = vdwg.mxu0
    %v1000 = vmax.f32 %v996, 0.0
    %v1001 = vmax.f32 %v998, 0.0
    %v1002 = vld [vmem:[%s11] sm:$0xff]
    %v1003 = vld [vmem:[%s11 + $0x8] sm:$0xff]
    %v1004 = vld [vmem:[%s11 + $0x10] sm:$0xff]
    %v1005 = vld [vmem:[%s11 + $0x18] sm:$0xff]
    %v1006 = vld [vmem:[%s11 + $0x20] sm:$0xff]
    %v1007 = vld [vmem:[%s11 + $0x28] sm:$0xff]
    %v1008 = vld [vmem:[%s11 + $0x30] sm:$0xff]
    %v1009 = vld [vmem:[%s11 + $0x38] sm:$0xff]
    %v1010 = vld [vmem:[%s11 + $0x40] sm:$0xff]
    %v1011 = vld [vmem:[%s11 + $0x48] sm:$0xff]
    %v1012 = vld [vmem:[%s11 + $0x50] sm:$0xff]
    %v1013 = vld [vmem:[%s11 + $0x58] sm:$0xff]
    %v1014 = vld [vmem:[%s11 + $0x60] sm:$0xff]
    %v1015 = vld [vmem:[%s11 + $0x68] sm:$0xff]
    %v1016 = vld [vmem:[%s11 + $0x70] sm:$0xff]
    %v1017 = vld [vmem:[%s11 + $0x78] sm:$0xff]
    %v1018 = vld [vmem:[%s11 + $0x80] sm:$0xff]
    %v1019 = vld [vmem:[%s11 + $0x88] sm:$0xff]
    %v1020 = vld [vmem:[%s11 + $0x90] sm:$0xff]
    %v1021 = vld [vmem:[%s11 + $0x98] sm:$0xff]
    %v1022 = vld [vmem:[%s11 + $0xa0] sm:$0xff]
    %v1023 = vld [vmem:[%s11 + $0xa8] sm:$0xff]
    %v1024 = vld [vmem:[%s11 + $0xb0] sm:$0xff]
    %v1025 = vld [vmem:[%s11 + $0xb8] sm:$0xff]
    %v1026 = vld [vmem:[%s12] sm:$0x1]
    %v1028 = vlaneseq
    %v1029 = vshrl.u32 %v1028, 7
    %v1030 = vsub.s32 0, %v1029
    %v1031 = vrot.slane %v1026, %v1030
    %vm1033 = vcmask 523264
    %v1035 = vsel %vm1033, %v1001, 0
    %1037 = vmatprep.subr.mxu0 0.0
    %1038 = vmatpush1.msra.mxu0 %v1017
    %1039 = vmatprep.subr.mxu0 0.0
    %1040 = vmatpush1.msra.mxu0 %v1016
    %1041 = vmatprep.subr.mxu0 0.0
    %1042 = vmatpush1.msra.mxu0 %v1015
    %1043 = vmatprep.subr.mxu0 0.0
    %1044 = vmatpush1.msra.mxu0 %v1014
    %1045 = vmatprep.subr.mxu0 0.0
    %1046 = vmatpush1.msra.mxu0 %v1013
    %1047 = vmatprep.subr.mxu0 0.0
    %1048 = vmatpush1.msra.mxu0 %v1012
    %1049 = vmatprep.subr.mxu0 0.0
    %1050 = vmatpush1.msra.mxu0 %v1011
    %1051 = vmatprep.subr.mxu0 0.0
    %1052 = vmatpush1.msra.mxu0 %v1010
    %1053 = vmatprep.subr.mxu0 0.0
    %1054 = vmatpush1.msra.mxu0 %v1009
    %1055 = vmatprep.subr.mxu0 0.0
    %1056 = vmatpush1.msra.mxu0 %v1008
    %1057 = vmatprep.subr.mxu0 0.0
    %1058 = vmatpush1.msra.mxu0 %v1007
    %1059 = vmatprep.subr.mxu0 0.0
    %1060 = vmatpush1.msra.mxu0 %v1006
    %1061 = vmatprep.subr.mxu0 0.0
    %1062 = vmatpush1.msra.mxu0 %v1005
    %1063 = vmatprep.subr.mxu0 0.0
    %1064 = vmatpush1.msra.mxu0 %v1004
    %1065 = vmatprep.subr.mxu0 0.0
    %1066 = vmatpush1.msra.mxu0 %v1003
    %1067 = vmatprep.subr.mxu0 0.0
    %1068 = vmatpush1.msra.mxu0 %v1002
    %1069 = vmatprep.subr.mxu0 0.0
    %1070 = vmatpush2.msra.mxu0 0.0
    %1071 = vmatprep.subr.mxu0 0.0
    %1072 = vmatpush2.msra.mxu0 0.0
    %1073 = vmatprep.subr.mxu0 0.0
    %1074 = vmatpush2.msra.mxu0 0.0
    %1075 = vmatprep.subr.mxu0 0.0
    %1076 = vmatpush2.msra.mxu0 0.0
    %1077 = vmatprep.subr.mxu0 0.0
    %1078 = vmatpush2.msra.mxu0 0.0
    %1079 = vmatprep.subr.mxu0 0.0
    %1080 = vmatpush2.msra.mxu0 0.0
    %1081 = vmatprep.subr.mxu0 0.0
    %1082 = vmatpush2.msra.mxu0 0.0
    %1083 = vmatprep.subr.mxu0 0.0
    %1084 = vmatpush2.msra.mxu0 0.0
    %1085 = vmatprep.subr.mxu0 0.0
    %1086 = vmatpush2.msra.mxu0 %v1025
    %1087 = vmatprep.subr.mxu0 0.0
    %1088 = vmatpush2.msra.mxu0 %v1024
    %1089 = vmatprep.subr.mxu0 0.0
    %1090 = vmatpush2.msra.mxu0 %v1023
    %1091 = vmatprep.subr.mxu0 0.0
    %1092 = vmatpush2.msra.mxu0 %v1022
    %1093 = vmatprep.subr.mxu0 0.0
    %1094 = vmatpush2.msra.mxu0 %v1021
    %1095 = vmatprep.subr.mxu0 0.0
    %1096 = vmatpush2.msra.mxu0 %v1020
    %1097 = vmatprep.subr.mxu0 0.0
    %1098 = vmatpush2.msra.mxu0 %v1019
    %1099 = vmatprep.subr.mxu0 0.0
    %1100 = vmatpush2.msra.mxu0 %v1018
    %1101 = vmatprep.mubr.f32.mxu0 %v1035
    %1102 = vmatmul.mubr.f32.gmra.mxu0 %v1000
    %v1103 = vpop.f32.mrf.mxu0
    %v1104 = vadd.f32 %v1031, %v1103
    %v1105 = vpop.f32.mrf.mxu0
    %1106 = vdwg.mxu0
    %v1107 = vmax.f32 %v1104, 0.0
    %v1110 = vunpack.c.l.s4 1983009808
    %v1111 = vunpack.c.0.s8 %v1110
    %v1112 = vlaneseq
    %v1113 = vshrl.u32 %v1112, 7
    %v1114 = vsub.s32 %v1111, %v1113
    %v1115 = vrot.slane %v1107, %v1114
    %1116 = vrot.lane.b32.xlu0 %v1115, 80
    %v1117 = vpop.permute.xlu0 %1116
    %v1118 = vrot.slane %v1117, 6
    %vm1119 = vcmask 654336
    %v1120 = vsel %vm1119, %v1118, %v1117
    %vm1122 = vcmask 1042048
    %vm1123 = vcmask 257026
    %vm1124 = vmor %vm1123, %vm1122
    %1125 = vst.msk [vmem:[#allocation2 + $0x4] sm:$0xf] %vm1124, %v1120
    // Predicated region
    $region54: #{conv_block_forward.1} parent=1 // pred_check
      _
    $region55: #{conv_block_forward.1} parent=1 // pred_check_branch
      %1127 = sbr.rel (0) target = $region57
    $region56: #{conv_block_forward.1} parent=1 // pred_region
      %s1129 = ssub.s32 128, 128
      %1130 = vsyncadd [#allocation3], %s1129
      %s1132 = sshll.u32 [#allocation2], 4
      %s1133 = int_to_ptr.vmem [resolvable:$true] %s1132
      %1135 = dma.vmem_to_hbm [thread:$0]  %s1133, 128, %s13, [#allocation3]
    $region57: #{conv_block_forward.1} parent=1 // pred_fallthru
      _
    // Predicated region
    $region58: #{conv_block_forward.1} parent=1 // pred_check
      _
    $region59: #{conv_block_forward.1} parent=1 // pred_check_branch
      %1137 = sbr.rel (0) target = $region61
    $region60: #{conv_block_forward.1} parent=1 // pred_region
      %1138 = dma.done [#allocation3], 128
    $region61: #{conv_block_forward.1} parent=1 // pred_fallthru
      _
    %1139 = vsyncpa [#allocation3], 1

</llo_original>
